<compile_context>
chip_gen: v6e
topology: v6e:2x2x1
jax: 0.10.0
libtpu: 0.0.40
codegen_flags: <defaults>
</compile_context>

<pallas_src>
import functools

import jax
import jax.numpy as jnp
from jax.experimental import pallas as pl
from jax.experimental.pallas import tpu as pltpu

NEG_SLOPE = 0.01   # nn.LeakyReLU default negative_slope
BN_EPS = 1e-5      # nn.BatchNorm1d default eps


# --------------------------------------------------------------------------- #
# Kernel
# --------------------------------------------------------------------------- #
def rtic_kernel(
    img_ref, txt_ref,                      # activations (unpadded widths)
    img_ss_ref, txt_ss_ref,                # (2, c_img) / (2, c_txt): BN scale;shift
    vecs_ref,                              # (5, ci): fs_b, g_b1, g_scale, g_shift, g_b2
    ee_vecs_ref,                           # (n_blocks, 6, ch): b1,s1,h1,b2,s2,h2
    ee_b3_ref,                             # (n_blocks, 1, ci)
    fs_w_i_ref, fs_w_t_ref,                # (c_img, ci), (c_txt, ci)  bf16
    gw1_ee1_ref,                           # (ci, ci+ch)  bf16  = [g_w1 | ee_w1[0]]
    g_w2_ref,                              # (ci, ci)     bf16
    ee_w1_ref, ee_w2_ref, ee_w3_ref,       # (n_blocks, ., .) bf16 (w1[0] unused)
    out_ref,                               # (tb, c_img)
    *, n_blocks, c_img, ci, unroll_blocks,
):
    bf16 = jnp.bfloat16

    def lrelu(x):
        return jnp.where(x >= 0, x, NEG_SLOPE * x)

    def dot(a_bf16, w_bf16):
        return jnp.dot(a_bf16, w_bf16, preferred_element_type=jnp.float32)

    img = img_ref[...]                     # (tb, c_img) fp32
    txt = txt_ref[...]                     # (tb, c_txt) fp32

    # --- RticFusionModule: BN1d(cat(img, txt)) -> LeakyReLU -> Linear -------
    # concat avoided: cat @ W == img_part @ W_i + txt_part @ W_t
    hi = lrelu(img * img_ss_ref[0:1, :] + img_ss_ref[1:2, :]).astype(bf16)
    ht = lrelu(txt * txt_ss_ref[0:1, :] + txt_ss_ref[1:2, :]).astype(bf16)
    f0 = dot(hi, fs_w_i_ref[...]) + dot(ht, fs_w_t_ref[...]) + vecs_ref[0:1, :]

    # --- fused dot: [gating Linear1 | EE block-0 Linear1] (single bf16 cast) -
    f0b = f0.astype(bf16)
    gh_eh = dot(f0b, gw1_ee1_ref[...])     # (tb, ci + ch)
    hg = gh_eh[:, :ci] + vecs_ref[1:2, :]  # gating pre-activation  (+ g_b1)
    he0 = gh_eh[:, ci:]                    # EE block-0 pre-activation (bias below)

    # --- RticGatingModule: -> BN -> LeakyReLU -> Linear -> Sigmoid ----------
    hg = lrelu(hg * vecs_ref[2:3, :] + vecs_ref[3:4, :]).astype(bf16)
    g = jax.nn.sigmoid(dot(hg, g_w2_ref[...]) + vecs_ref[4:5, :])   # sigmoid -> EUP

    # --- n_blocks x RticErrorEncodingModule (residual bottleneck MLP) -------
    def ee_tail(h_pre, eev, w2, w3, b3, f_in):
        h = lrelu(h_pre * eev[1:2, :] + eev[2:3, :]).astype(bf16)
        h = dot(h, w2) + eev[3:4, :]
        h = lrelu(h * eev[4:5, :] + eev[5:6, :]).astype(bf16)
        return dot(h, w3) + b3 + f_in

    eev0 = ee_vecs_ref[0]
    f = ee_tail(he0 + eev0[0:1, :], eev0,
                ee_w2_ref[0], ee_w3_ref[0], ee_b3_ref[0], f0)

    def ee_block(blk, f_in):               # works with static or traced blk
        eev = ee_vecs_ref[blk]
        h_pre = dot(f_in.astype(bf16), ee_w1_ref[blk]) + eev[0:1, :]
        return ee_tail(h_pre, eev, ee_w2_ref[blk], ee_w3_ref[blk],
                       ee_b3_ref[blk], f_in)

    if n_blocks > 1:
        if unroll_blocks:                  # small depth: fully unrolled
            for blk in range(1, n_blocks):
                f = ee_block(blk, f)
        else:                              # large depth: bounded live ranges
            f = jax.lax.fori_loop(1, n_blocks, ee_block, f)

    # --- composition: out = x[0] * g + f * (1 - g) (real lanes only) --------
    g_r = g[:, :c_img]
    f_r = f[:, :c_img]
    out_ref[...] = img * g_r + f_r * (1.0 - g_r)


# --------------------------------------------------------------------------- #
# Host-side parameter prep (runs once, outside the hot path)
# --------------------------------------------------------------------------- #
def _fold_bn(gamma, beta, mean, var):
    """BatchNorm1d (eval mode) folded to per-feature scale/shift row vectors."""
    scale = gamma / jnp.sqrt(var + BN_EPS)
    shift = beta - mean * scale
    return scale[None, :], shift[None, :]


def _round_up(x, m=128):
    return ((x + m - 1) // m) * m


def _pad_to(x, shape):
    return jnp.pad(x, [(0, t - s) for s, t in zip(x.shape, shape)])


def init_params(key, c_img, c_txt, n_blocks):
    c_half = c_img // 2
    c_cat = c_img + c_txt

    def nrm(k, shape, s=0.05):
        return s * jax.random.normal(k, shape, dtype=jnp.float32)

    keys = iter(jax.random.split(key, 16 + 14 * max(n_blocks, 1)))
    p = {}

    # RticFusionModule: BN1d(c_cat) -> LeakyReLU -> Linear(c_cat, c_img)
    g_ = 1.0 + nrm(next(keys), (c_cat,)); b_ = nrm(next(keys), (c_cat,))
    m_ = nrm(next(keys), (c_cat,));       v_ = 1.0 + 0.1 * jnp.abs(nrm(next(keys), (c_cat,)))
    sc, sh = _fold_bn(g_, b_, m_, v_)
    p["fs_scale_i"], p["fs_shift_i"] = sc[:, :c_img], sh[:, :c_img]
    p["fs_scale_t"], p["fs_shift_t"] = sc[:, c_img:], sh[:, c_img:]
    fs_w = nrm(next(keys), (c_cat, c_img))
    p["fs_w_i"], p["fs_w_t"] = fs_w[:c_img], fs_w[c_img:]
    p["fs_b"] = nrm(next(keys), (1, c_img))

    # RticGatingModule: Linear -> BN -> LeakyReLU -> Linear -> Sigmoid
    p["g_w1"] = nrm(next(keys), (c_img, c_img)); p["g_b1"] = nrm(next(keys), (1, c_img))
    g_ = 1.0 + nrm(next(keys), (c_img,)); b_ = nrm(next(keys), (c_img,))
    m_ = nrm(next(keys), (c_img,));       v_ = 1.0 + 0.1 * jnp.abs(nrm(next(keys), (c_img,)))
    p["g_scale"], p["g_shift"] = _fold_bn(g_, b_, m_, v_)
    p["g_w2"] = nrm(next(keys), (c_img, c_img)); p["g_b2"] = nrm(next(keys), (1, c_img))

    # RticErrorEncodingModule x n_blocks
    w1, b1, s1, h1 = [], [], [], []
    w2, b2, s2, h2 = [], [], [], []
    w3, b3 = [], []
    for _ in range(n_blocks):
        w1.append(nrm(next(keys), (c_img, c_half))); b1.append(nrm(next(keys), (1, c_half)))
        g_ = 1.0 + nrm(next(keys), (c_half,)); be = nrm(next(keys), (c_half,))
        m_ = nrm(next(keys), (c_half,));       v_ = 1.0 + 0.1 * jnp.abs(nrm(next(keys), (c_half,)))
        sc, sh = _fold_bn(g_, be, m_, v_); s1.append(sc); h1.append(sh)
        w2.append(nrm(next(keys), (c_half, c_half))); b2.append(nrm(next(keys), (1, c_half)))
        g_ = 1.0 + nrm(next(keys), (c_half,)); be = nrm(next(keys), (c_half,))
        m_ = nrm(next(keys), (c_half,));       v_ = 1.0 + 0.1 * jnp.abs(nrm(next(keys), (c_half,)))
        sc, sh = _fold_bn(g_, be, m_, v_); s2.append(sc); h2.append(sh)
        w3.append(nrm(next(keys), (c_half, c_img))); b3.append(nrm(next(keys), (1, c_img)))
    p["ee_w1"] = jnp.stack(w1); p["ee_b1"] = jnp.stack(b1)
    p["ee_s1"] = jnp.stack(s1); p["ee_h1"] = jnp.stack(h1)
    p["ee_w2"] = jnp.stack(w2); p["ee_b2"] = jnp.stack(b2)
    p["ee_s2"] = jnp.stack(s2); p["ee_h2"] = jnp.stack(h2)
    p["ee_w3"] = jnp.stack(w3); p["ee_b3"] = jnp.stack(b3)
    return p


_PREPARED_ORDER = ["img_ss", "txt_ss", "vecs_ci", "ee_vecs", "ee_b3",
                   "fs_w_i", "fs_w_t", "gw1_ee1", "g_w2",
                   "ee_w1", "ee_w2", "ee_w3"]


def prepare_params(p, c_img, c_txt, n_blocks):
    """One-time prep: merge small vectors into slabs, zero-pad only the lane (N)
    dims of the weights to 128 multiples, fuse g_w1 || ee_w1[0], cast weights
    to bf16.  Padded lanes stay exactly zero end-to-end."""
    assert n_blocks >= 1, "n_blocks must be >= 1"
    c_half = c_img // 2
    ci, ch = _round_up(c_img), _round_up(c_half)
    wt = jnp.bfloat16

    img_ss = jnp.concatenate([p["fs_scale_i"], p["fs_shift_i"]], axis=0)   # (2, c_img)
    txt_ss = jnp.concatenate([p["fs_scale_t"], p["fs_shift_t"]], axis=0)   # (2, c_txt)

    vecs_ci = jnp.concatenate([
        _pad_to(p["fs_b"],    (1, ci)),
        _pad_to(p["g_b1"],    (1, ci)),
        _pad_to(p["g_scale"], (1, ci)),
        _pad_to(p["g_shift"], (1, ci)),
        _pad_to(p["g_b2"],    (1, ci)),
    ], axis=0)                                                             # (5, ci)

    ee_vecs = jnp.stack([jnp.concatenate([
        _pad_to(p["ee_b1"][b], (1, ch)),
        _pad_to(p["ee_s1"][b], (1, ch)),
        _pad_to(p["ee_h1"][b], (1, ch)),
        _pad_to(p["ee_b2"][b], (1, ch)),
        _pad_to(p["ee_s2"][b], (1, ch)),
        _pad_to(p["ee_h2"][b], (1, ch)),
    ], axis=0) for b in range(n_blocks)])                                  # (nb, 6, ch)

    ee_b3 = _pad_to(p["ee_b3"], (n_blocks, 1, ci))                          # (nb, 1, ci)

    fs_w_i = _pad_to(p["fs_w_i"], (c_img, ci)).astype(wt)   # K left unpadded
    fs_w_t = _pad_to(p["fs_w_t"], (c_txt, ci)).astype(wt)

    g_w1_p  = _pad_to(p["g_w1"],  (ci, ci))
    ee_w1_p = _pad_to(p["ee_w1"], (n_blocks, ci, ch))
    gw1_ee1 = jnp.concatenate([g_w1_p, ee_w1_p[0]], axis=1).astype(wt)      # (ci, ci+ch)

    g_w2  = _pad_to(p["g_w2"], (ci, ci)).astype(wt)
    ee_w1 = ee_w1_p.astype(wt)   # block 0 slice unused in-kernel (kept for simple shape)
    ee_w2 = _pad_to(p["ee_w2"], (n_blocks, ch, ch)).astype(wt)
    ee_w3 = _pad_to(p["ee_w3"], (n_blocks, ch, ci)).astype(wt)

    return dict(img_ss=img_ss, txt_ss=txt_ss, vecs_ci=vecs_ci, ee_vecs=ee_vecs,
                ee_b3=ee_b3, fs_w_i=fs_w_i, fs_w_t=fs_w_t, gw1_ee1=gw1_ee1,
                g_w2=g_w2, ee_w1=ee_w1, ee_w2=ee_w2, ee_w3=ee_w3,
                ci=ci, ch=ch)


# --------------------------------------------------------------------------- #
# Tiling / VMEM heuristics
# --------------------------------------------------------------------------- #
def _default_batch_tile(B):
    """Single grid step unless the batch is large enough that every step still
    feeds the MXU >= 128 rows (keeps weights amortized; lets a v7x megacore
    shard only when both halves stay well fed).  Cap at 512 rows/step."""
    if B < 256:
        return B
    for tb in (512, 384, 256, 128):
        if B % tb == 0 and B // tb >= 2:
            return tb
    return B


def _pick_vmem_limit(param_bytes, tb, c_img, c_txt, ci, ch):
    act_bytes = tb * 4 * (c_img + c_txt + 4 * ci + 2 * ch)     # rough live activations
    needed = 2 * param_bytes + 2 * act_bytes + (4 << 20)
    try:   # generation-aware cap: 3/4 of physical VMEM (v5e/v6e 128MiB, v7x 64MiB)
        cap_phys = int(pltpu.get_tpu_info().vmem_capacity_bytes)
    except Exception:
        cap_phys = 64 << 20                                    # conservative fallback
    cap = (cap_phys * 3) // 4
    return max(16 << 20, min(needed, cap))


def _const_spec(shape):
    nd = len(shape)
    return pl.BlockSpec(shape, lambda i, _nd=nd: (0,) * _nd)   # VMEM-resident across grid


# --------------------------------------------------------------------------- #
# Wrapper
# --------------------------------------------------------------------------- #
def build_rtic_forward(params, c_img, c_txt, n_blocks, batch_tile=None,
                       unroll_threshold=8):
    """Prepare parameters once and return a jitted forward(img, txt) callable."""
    pp = prepare_params(params, c_img, c_txt, n_blocks)
    ci, ch = pp["ci"], pp["ch"]
    prepared = tuple(pp[k] for k in _PREPARED_ORDER)
    param_bytes = sum(int(a.size) * a.dtype.itemsize for a in prepared)
    unroll_blocks = n_blocks <= unroll_threshold

    @jax.jit
    def forward(img, txt, *prep):
        B = img.shape[0]
        tb = batch_tile if batch_tile is not None else _default_batch_tile(B)
        assert B % tb == 0, "batch must be divisible by batch_tile"
        assert tb == B or tb % 8 == 0, "batch_tile must be a multiple of 8"

        flops_per_row = (2 * (c_img + c_txt) * ci              # fusion
                         + 2 * ci * (ci + ch)                  # fused g_w1 | ee_w1[0]
                         + 2 * ci * ci                         # g_w2
                         + 2 * (ch * ch + ch * ci)             # EE block 0 tail
                         + (n_blocks - 1) * 2 * (ci * ch + ch * ch + ch * ci))
        io_bytes = B * 4 * (2 * c_img + c_txt)
        cost = pl.CostEstimate(flops=B * flops_per_row,
                               transcendentals=B * ci,
                               bytes_accessed=param_bytes + io_bytes)
        vmem_limit = _pick_vmem_limit(param_bytes, tb, c_img, c_txt, ci, ch)

        data_spec = lambda c: pl.BlockSpec((tb, c), lambda i: (i, 0))
        in_specs = [data_spec(c_img), data_spec(c_txt)]
        in_specs += [_const_spec(a.shape) for a in prep]

        return pl.pallas_call(
            functools.partial(rtic_kernel, n_blocks=n_blocks, c_img=c_img,
                              ci=ci, unroll_blocks=unroll_blocks),
            out_shape=jax.ShapeDtypeStruct((B, c_img), jnp.float32),
            grid=(B // tb,),
            in_specs=in_specs,
            out_specs=pl.BlockSpec((tb, c_img), lambda i: (i, 0)),
            compiler_params=pltpu.CompilerParams(
                dimension_semantics=("parallel",),
                vmem_limit_bytes=int(vmem_limit)),
            cost_estimate=cost,
        )(img.astype(jnp.float32), txt.astype(jnp.float32), *prep)

    def fwd(img, txt):
        return forward(img, txt, *prepared)

    return fwd


# --------------------------------------------------------------------------- #
# References (for correctness check)
# --------------------------------------------------------------------------- #
def rtic_ref_bf16(img, txt, pp, n_blocks, c_img):
    """Mirrors kernel numerics: bf16 matmul inputs, fp32 MXU accumulation."""
    lrelu = lambda x: jnp.where(x >= 0, x, NEG_SLOPE * x)
    dot = lambda a, w: jnp.dot(a.astype(jnp.bfloat16), w,
                               preferred_element_type=jnp.float32)
    ci = pp["ci"]
    hi = lrelu(img * pp["img_ss"][0:1] + pp["img_ss"][1:2])
    ht = lrelu(txt * pp["txt_ss"][0:1] + pp["txt_ss"][1:2])
    f0 = dot(hi, pp["fs_w_i"]) + dot(ht, pp["fs_w_t"]) + pp["vecs_ci"][0:1]
    gh_eh = dot(f0, pp["gw1_ee1"])
    hg = gh_eh[:, :ci] + pp["vecs_ci"][1:2]
    hg = lrelu(hg * pp["vecs_ci"][2:3] + pp["vecs_ci"][3:4])
    g = jax.nn.sigmoid(dot(hg, pp["g_w2"]) + pp["vecs_ci"][4:5])
    f = f0
    for blk in range(n_blocks):
        eev = pp["ee_vecs"][blk]
        if blk == 0:
            h = gh_eh[:, ci:] + eev[0:1]
        else:
            h = dot(f, pp["ee_w1"][blk]) + eev[0:1]
        h = lrelu(h * eev[1:2] + eev[2:3])
        h = dot(h, pp["ee_w2"][blk]) + eev[3:4]
        h = lrelu(h * eev[4:5] + eev[5:6])
        f = dot(h, pp["ee_w3"][blk]) + pp["ee_b3"][blk] + f
    g_r, f_r = g[:, :c_img], f[:, :c_img]
    return img * g_r + f_r * (1.0 - g_r)


def rtic_ref_fp32(img, txt, p, n_blocks):
    """Pure-fp32 reference of the original module (eval-mode folded BN)."""
    lrelu = lambda x: jnp.where(x >= 0, x, NEG_SLOPE * x)
    hi = lrelu(img * p["fs_scale_i"] + p["fs_shift_i"])
    ht = lrelu(txt * p["fs_scale_t"] + p["fs_shift_t"])
    f = hi @ p["fs_w_i"] + ht @ p["fs_w_t"] + p["fs_b"]
    h = f @ p["g_w1"] + p["g_b1"]
    h = lrelu(h * p["g_scale"] + p["g_shift"])
    g = jax.nn.sigmoid(h @ p["g_w2"] + p["g_b2"])
    for blk in range(n_blocks):
        h = lrelu((f @ p["ee_w1"][blk] + p["ee_b1"][blk]) * p["ee_s1"][blk] + p["ee_h1"][blk])
        h = lrelu((h @ p["ee_w2"][blk] + p["ee_b2"][blk]) * p["ee_s2"][blk] + p["ee_h2"][blk])
        f = h @ p["ee_w3"][blk] + p["ee_b3"][blk] + f
    return img * g + f * (1.0 - g)


if __name__ == "__main__":
    B, C_IMG, C_TXT, N_BLOCKS = 16, 64, 32, 2   # B=16 < 256 -> single grid step

    key = jax.random.PRNGKey(0)
    k_img, k_txt, k_par = jax.random.split(key, 3)
    img = jax.random.normal(k_img, (B, C_IMG), dtype=jnp.float32)
    txt = jax.random.normal(k_txt, (B, C_TXT), dtype=jnp.float32)
    params = init_params(k_par, C_IMG, C_TXT, N_BLOCKS)

    fwd = build_rtic_forward(params, C_IMG, C_TXT, N_BLOCKS)   # params prepared once
    out = jax.block_until_ready(fwd(img, txt))
    assert out.shape == (B, C_IMG)

    # exact-precision-matched reference (bf16 matmul inputs, fp32 accumulate)
    pp = prepare_params(params, C_IMG, C_TXT, N_BLOCKS)
    ref_bf = jax.block_until_ready(rtic_ref_bf16(img, txt, pp, N_BLOCKS, C_IMG))
    assert jnp.allclose(out, ref_bf, atol=2e-3, rtol=2e-3), "kernel/bf16-reference mismatch"

    # sanity vs original fp32 math (bf16 weight quantization -> ~1e-3-level error,
    # NOT a kernel bug; hence the looser tolerance)
    ref_f32 = jax.block_until_ready(rtic_ref_fp32(img, txt, params, N_BLOCKS))
    assert jnp.allclose(out, ref_f32, atol=3e-2, rtol=3e-2), "kernel/fp32-reference mismatch"

    print("KERNEL_OK")
</pallas_src>

<mosaic_0001>
module attributes {stable_mosaic.version = 11 : i64} {
  func.func @rtic_kernel(%arg0: i32, %arg1: memref<16x64xf32, #tpu.memory_space<vmem>>, %arg2: memref<16x32xf32, #tpu.memory_space<vmem>>, %arg3: memref<2x64xf32, #tpu.memory_space<vmem>>, %arg4: memref<2x32xf32, #tpu.memory_space<vmem>>, %arg5: memref<5x128xf32, #tpu.memory_space<vmem>>, %arg6: memref<2x6x128xf32, #tpu.memory_space<vmem>>, %arg7: memref<2x1x128xf32, #tpu.memory_space<vmem>>, %arg8: memref<64x128xbf16, #tpu.memory_space<vmem>>, %arg9: memref<32x128xbf16, #tpu.memory_space<vmem>>, %arg10: memref<128x256xbf16, #tpu.memory_space<vmem>>, %arg11: memref<128x128xbf16, #tpu.memory_space<vmem>>, %arg12: memref<2x128x128xbf16, #tpu.memory_space<vmem>>, %arg13: memref<2x128x128xbf16, #tpu.memory_space<vmem>>, %arg14: memref<2x128x128xbf16, #tpu.memory_space<vmem>>, %arg15: memref<16x64xf32, #tpu.memory_space<vmem>>) attributes {dimension_semantics = [#tpu.dimension_semantics<parallel>], iteration_bounds = array<i64: 1>, scalar_prefetch = 0 : i64, scratch_operands = 0 : i64, tpu.core_type = #tpu.core_type<tc>, window_params = [{transform_indices = @transform_0, window_bounds = array<i64: 16, 64>}, {transform_indices = @transform_1, window_bounds = array<i64: 16, 32>}, {pipeline_mode = #tpu.pipeline_mode<synchronous>, transform_indices = @transform_2, window_bounds = array<i64: 2, 64>}, {pipeline_mode = #tpu.pipeline_mode<synchronous>, transform_indices = @transform_3, window_bounds = array<i64: 2, 32>}, {pipeline_mode = #tpu.pipeline_mode<synchronous>, transform_indices = @transform_4, window_bounds = array<i64: 5, 128>}, {pipeline_mode = #tpu.pipeline_mode<synchronous>, transform_indices = @transform_5, window_bounds = array<i64: 2, 6, 128>}, {pipeline_mode = #tpu.pipeline_mode<synchronous>, transform_indices = @transform_6, window_bounds = array<i64: 2, 1, 128>}, {pipeline_mode = #tpu.pipeline_mode<synchronous>, transform_indices = @transform_7, window_bounds = array<i64: 64, 128>}, {pipeline_mode = #tpu.pipeline_mode<synchronous>, transform_indices = @transform_8, window_bounds = array<i64: 32, 128>}, {pipeline_mode = #tpu.pipeline_mode<synchronous>, transform_indices = @transform_9, window_bounds = array<i64: 128, 256>}, {pipeline_mode = #tpu.pipeline_mode<synchronous>, transform_indices = @transform_10, window_bounds = array<i64: 128, 128>}, {pipeline_mode = #tpu.pipeline_mode<synchronous>, transform_indices = @transform_11, window_bounds = array<i64: 2, 128, 128>}, {pipeline_mode = #tpu.pipeline_mode<synchronous>, transform_indices = @transform_12, window_bounds = array<i64: 2, 128, 128>}, {pipeline_mode = #tpu.pipeline_mode<synchronous>, transform_indices = @transform_13, window_bounds = array<i64: 2, 128, 128>}, {transform_indices = @transform_14, window_bounds = array<i64: 16, 64>}]} {
    %c0 = arith.constant 0 : index
    %c0_0 = arith.constant 0 : index
    %0 = vector.load %arg1[%c0, %c0_0] : memref<16x64xf32, #tpu.memory_space<vmem>>, vector<16x64xf32>
    %c0_1 = arith.constant 0 : index
    %c0_2 = arith.constant 0 : index
    %1 = vector.load %arg2[%c0_1, %c0_2] : memref<16x32xf32, #tpu.memory_space<vmem>>, vector<16x32xf32>
    %c0_3 = arith.constant 0 : index
    %c0_4 = arith.constant 0 : index
    %2 = vector.load %arg3[%c0_3, %c0_4] : memref<2x64xf32, #tpu.memory_space<vmem>>, vector<1x64xf32>
    %3 = vector.broadcast %2 : vector<1x64xf32> to vector<16x64xf32>
    %4 = arith.mulf %0, %3 : vector<16x64xf32>
    %c1 = arith.constant 1 : index
    %c0_5 = arith.constant 0 : index
    %5 = vector.load %arg3[%c1, %c0_5] : memref<2x64xf32, #tpu.memory_space<vmem>>, vector<1x64xf32>
    %6 = vector.broadcast %5 : vector<1x64xf32> to vector<16x64xf32>
    %7 = arith.addf %4, %6 : vector<16x64xf32>
    %cst = arith.constant 0.000000e+00 : f32
    %8 = vector.broadcast %cst : f32 to vector<16x64xf32>
    %9 = arith.cmpf oge, %7, %8 : vector<16x64xf32>
    %cst_6 = arith.constant 0.00999999977 : f32
    %10 = vector.broadcast %cst_6 : f32 to vector<16x64xf32>
    %11 = arith.mulf %10, %7 : vector<16x64xf32>
    %12 = arith.select %9, %7, %11 : vector<16x64xi1>, vector<16x64xf32>
    %13 = arith.truncf %12 : vector<16x64xf32> to vector<16x64xbf16>
    %c0_7 = arith.constant 0 : index
    %c0_8 = arith.constant 0 : index
    %14 = vector.load %arg4[%c0_7, %c0_8] : memref<2x32xf32, #tpu.memory_space<vmem>>, vector<1x32xf32>
    %15 = vector.broadcast %14 : vector<1x32xf32> to vector<16x32xf32>
    %16 = arith.mulf %1, %15 : vector<16x32xf32>
    %c1_9 = arith.constant 1 : index
    %c0_10 = arith.constant 0 : index
    %17 = vector.load %arg4[%c1_9, %c0_10] : memref<2x32xf32, #tpu.memory_space<vmem>>, vector<1x32xf32>
    %18 = vector.broadcast %17 : vector<1x32xf32> to vector<16x32xf32>
    %19 = arith.addf %16, %18 : vector<16x32xf32>
    %cst_11 = arith.constant 0.000000e+00 : f32
    %20 = vector.broadcast %cst_11 : f32 to vector<16x32xf32>
    %21 = arith.cmpf oge, %19, %20 : vector<16x32xf32>
    %cst_12 = arith.constant 0.00999999977 : f32
    %22 = vector.broadcast %cst_12 : f32 to vector<16x32xf32>
    %23 = arith.mulf %22, %19 : vector<16x32xf32>
    %24 = arith.select %21, %19, %23 : vector<16x32xi1>, vector<16x32xf32>
    %25 = arith.truncf %24 : vector<16x32xf32> to vector<16x32xbf16>
    %c0_13 = arith.constant 0 : index
    %c0_14 = arith.constant 0 : index
    %26 = vector.load %arg8[%c0_13, %c0_14] : memref<64x128xbf16, #tpu.memory_space<vmem>>, vector<64x128xbf16>
    %cst_15 = arith.constant dense<0.000000e+00> : vector<16x128xf32>
    %27 = tpu.matmul %13, %26, %cst_15 {dimension_numbers = #tpu.dot_dimension_numbers<[1], [0], [0], [1], [0, 0, 1, 1], [], []>} : vector<16x64xbf16>, vector<64x128xbf16>, vector<16x128xf32> -> vector<16x128xf32>
    %c0_16 = arith.constant 0 : index
    %c0_17 = arith.constant 0 : index
    %28 = vector.load %arg9[%c0_16, %c0_17] : memref<32x128xbf16, #tpu.memory_space<vmem>>, vector<32x128xbf16>
    %cst_18 = arith.constant dense<0.000000e+00> : vector<16x128xf32>
    %29 = tpu.matmul %25, %28, %cst_18 {dimension_numbers = #tpu.dot_dimension_numbers<[1], [0], [0], [1], [0, 0, 1, 1], [], []>} : vector<16x32xbf16>, vector<32x128xbf16>, vector<16x128xf32> -> vector<16x128xf32>
    %30 = arith.addf %27, %29 : vector<16x128xf32>
    %c0_19 = arith.constant 0 : index
    %c0_20 = arith.constant 0 : index
    %31 = vector.load %arg5[%c0_19, %c0_20] : memref<5x128xf32, #tpu.memory_space<vmem>>, vector<1x128xf32>
    %32 = vector.broadcast %31 : vector<1x128xf32> to vector<16x128xf32>
    %33 = arith.addf %30, %32 : vector<16x128xf32>
    %34 = arith.truncf %33 : vector<16x128xf32> to vector<16x128xbf16>
    %c0_21 = arith.constant 0 : index
    %c0_22 = arith.constant 0 : index
    %35 = vector.load %arg10[%c0_21, %c0_22] : memref<128x256xbf16, #tpu.memory_space<vmem>>, vector<128x256xbf16>
    %cst_23 = arith.constant dense<0.000000e+00> : vector<16x256xf32>
    %36 = tpu.matmul %34, %35, %cst_23 {dimension_numbers = #tpu.dot_dimension_numbers<[1], [0], [0], [1], [0, 0, 1, 1], [], []>} : vector<16x128xbf16>, vector<128x256xbf16>, vector<16x256xf32> -> vector<16x256xf32>
    %37 = vector.extract_strided_slice %36 {offsets = [0, 0], sizes = [16, 128], strides = [1, 1]} : vector<16x256xf32> to vector<16x128xf32>
    %c1_24 = arith.constant 1 : index
    %c0_25 = arith.constant 0 : index
    %38 = vector.load %arg5[%c1_24, %c0_25] : memref<5x128xf32, #tpu.memory_space<vmem>>, vector<1x128xf32>
    %39 = vector.broadcast %38 : vector<1x128xf32> to vector<16x128xf32>
    %40 = arith.addf %37, %39 : vector<16x128xf32>
    %41 = vector.extract_strided_slice %36 {offsets = [0, 128], sizes = [16, 128], strides = [1, 1]} : vector<16x256xf32> to vector<16x128xf32>
    %c2 = arith.constant 2 : index
    %c0_26 = arith.constant 0 : index
    %42 = vector.load %arg5[%c2, %c0_26] : memref<5x128xf32, #tpu.memory_space<vmem>>, vector<1x128xf32>
    %43 = vector.broadcast %42 : vector<1x128xf32> to vector<16x128xf32>
    %44 = arith.mulf %40, %43 : vector<16x128xf32>
    %c3 = arith.constant 3 : index
    %c0_27 = arith.constant 0 : index
    %45 = vector.load %arg5[%c3, %c0_27] : memref<5x128xf32, #tpu.memory_space<vmem>>, vector<1x128xf32>
    %46 = vector.broadcast %45 : vector<1x128xf32> to vector<16x128xf32>
    %47 = arith.addf %44, %46 : vector<16x128xf32>
    %cst_28 = arith.constant 0.000000e+00 : f32
    %48 = vector.broadcast %cst_28 : f32 to vector<16x128xf32>
    %49 = arith.cmpf oge, %47, %48 : vector<16x128xf32>
    %cst_29 = arith.constant 0.00999999977 : f32
    %50 = vector.broadcast %cst_29 : f32 to vector<16x128xf32>
    %51 = arith.mulf %50, %47 : vector<16x128xf32>
    %52 = arith.select %49, %47, %51 : vector<16x128xi1>, vector<16x128xf32>
    %53 = arith.truncf %52 : vector<16x128xf32> to vector<16x128xbf16>
    %c0_30 = arith.constant 0 : index
    %c0_31 = arith.constant 0 : index
    %54 = vector.load %arg11[%c0_30, %c0_31] : memref<128x128xbf16, #tpu.memory_space<vmem>>, vector<128x128xbf16>
    %cst_32 = arith.constant dense<0.000000e+00> : vector<16x128xf32>
    %55 = tpu.matmul %53, %54, %cst_32 {dimension_numbers = #tpu.dot_dimension_numbers<[1], [0], [0], [1], [0, 0, 1, 1], [], []>} : vector<16x128xbf16>, vector<128x128xbf16>, vector<16x128xf32> -> vector<16x128xf32>
    %c4 = arith.constant 4 : index
    %c0_33 = arith.constant 0 : index
    %56 = vector.load %arg5[%c4, %c0_33] : memref<5x128xf32, #tpu.memory_space<vmem>>, vector<1x128xf32>
    %57 = vector.broadcast %56 : vector<1x128xf32> to vector<16x128xf32>
    %58 = arith.addf %55, %57 : vector<16x128xf32>
    %59 = arith.negf %58 : vector<16x128xf32>
    %60 = math.exp %59 : vector<16x128xf32>
    %cst_34 = arith.constant 1.000000e+00 : f32
    %61 = vector.broadcast %cst_34 : f32 to vector<16x128xf32>
    %62 = arith.addf %61, %60 : vector<16x128xf32>
    %63 = arith.divf %61, %62 : vector<16x128xf32>
    %c0_35 = arith.constant 0 : index
    %c0_36 = arith.constant 0 : index
    %c0_37 = arith.constant 0 : index
    %64 = vector.load %arg6[%c0_35, %c0_36, %c0_37] : memref<2x6x128xf32, #tpu.memory_space<vmem>>, vector<1x6x128xf32>
    %65 = vector.shape_cast %64 : vector<1x6x128xf32> to vector<6x128xf32>
    %66 = vector.extract_strided_slice %65 {offsets = [0, 0], sizes = [1, 128], strides = [1, 1]} : vector<6x128xf32> to vector<1x128xf32>
    %67 = vector.broadcast %66 : vector<1x128xf32> to vector<16x128xf32>
    %68 = arith.addf %41, %67 : vector<16x128xf32>
    %c0_38 = arith.constant 0 : index
    %c0_39 = arith.constant 0 : index
    %c0_40 = arith.constant 0 : index
    %69 = vector.load %arg13[%c0_38, %c0_39, %c0_40] : memref<2x128x128xbf16, #tpu.memory_space<vmem>>, vector<1x128x128xbf16>
    %70 = vector.shape_cast %69 : vector<1x128x128xbf16> to vector<128x128xbf16>
    %c0_41 = arith.constant 0 : index
    %c0_42 = arith.constant 0 : index
    %c0_43 = arith.constant 0 : index
    %71 = vector.load %arg14[%c0_41, %c0_42, %c0_43] : memref<2x128x128xbf16, #tpu.memory_space<vmem>>, vector<1x128x128xbf16>
    %72 = vector.shape_cast %71 : vector<1x128x128xbf16> to vector<128x128xbf16>
    %c0_44 = arith.constant 0 : index
    %c0_45 = arith.constant 0 : index
    %c0_46 = arith.constant 0 : index
    %73 = vector.load %arg7[%c0_44, %c0_45, %c0_46] : memref<2x1x128xf32, #tpu.memory_space<vmem>>, vector<1x1x128xf32>
    %74 = vector.shape_cast %73 : vector<1x1x128xf32> to vector<1x128xf32>
    %75 = vector.extract_strided_slice %65 {offsets = [1, 0], sizes = [1, 128], strides = [1, 1]} : vector<6x128xf32> to vector<1x128xf32>
    %76 = vector.broadcast %75 : vector<1x128xf32> to vector<16x128xf32>
    %77 = arith.mulf %68, %76 : vector<16x128xf32>
    %78 = vector.extract_strided_slice %65 {offsets = [2, 0], sizes = [1, 128], strides = [1, 1]} : vector<6x128xf32> to vector<1x128xf32>
    %79 = vector.broadcast %78 : vector<1x128xf32> to vector<16x128xf32>
    %80 = arith.addf %77, %79 : vector<16x128xf32>
    %cst_47 = arith.constant 0.000000e+00 : f32
    %81 = vector.broadcast %cst_47 : f32 to vector<16x128xf32>
    %82 = arith.cmpf oge, %80, %81 : vector<16x128xf32>
    %cst_48 = arith.constant 0.00999999977 : f32
    %83 = vector.broadcast %cst_48 : f32 to vector<16x128xf32>
    %84 = arith.mulf %83, %80 : vector<16x128xf32>
    %85 = arith.select %82, %80, %84 : vector<16x128xi1>, vector<16x128xf32>
    %86 = arith.truncf %85 : vector<16x128xf32> to vector<16x128xbf16>
    %cst_49 = arith.constant dense<0.000000e+00> : vector<16x128xf32>
    %87 = tpu.matmul %86, %70, %cst_49 {dimension_numbers = #tpu.dot_dimension_numbers<[1], [0], [0], [1], [0, 0, 1, 1], [], []>} : vector<16x128xbf16>, vector<128x128xbf16>, vector<16x128xf32> -> vector<16x128xf32>
    %88 = vector.extract_strided_slice %65 {offsets = [3, 0], sizes = [1, 128], strides = [1, 1]} : vector<6x128xf32> to vector<1x128xf32>
    %89 = vector.broadcast %88 : vector<1x128xf32> to vector<16x128xf32>
    %90 = arith.addf %87, %89 : vector<16x128xf32>
    %91 = vector.extract_strided_slice %65 {offsets = [4, 0], sizes = [1, 128], strides = [1, 1]} : vector<6x128xf32> to vector<1x128xf32>
    %92 = vector.broadcast %91 : vector<1x128xf32> to vector<16x128xf32>
    %93 = arith.mulf %90, %92 : vector<16x128xf32>
    %94 = vector.extract_strided_slice %65 {offsets = [5, 0], sizes = [1, 128], strides = [1, 1]} : vector<6x128xf32> to vector<1x128xf32>
    %95 = vector.broadcast %94 : vector<1x128xf32> to vector<16x128xf32>
    %96 = arith.addf %93, %95 : vector<16x128xf32>
    %cst_50 = arith.constant 0.000000e+00 : f32
    %97 = vector.broadcast %cst_50 : f32 to vector<16x128xf32>
    %98 = arith.cmpf oge, %96, %97 : vector<16x128xf32>
    %cst_51 = arith.constant 0.00999999977 : f32
    %99 = vector.broadcast %cst_51 : f32 to vector<16x128xf32>
    %100 = arith.mulf %99, %96 : vector<16x128xf32>
    %101 = arith.select %98, %96, %100 : vector<16x128xi1>, vector<16x128xf32>
    %102 = arith.truncf %101 : vector<16x128xf32> to vector<16x128xbf16>
    %cst_52 = arith.constant dense<0.000000e+00> : vector<16x128xf32>
    %103 = tpu.matmul %102, %72, %cst_52 {dimension_numbers = #tpu.dot_dimension_numbers<[1], [0], [0], [1], [0, 0, 1, 1], [], []>} : vector<16x128xbf16>, vector<128x128xbf16>, vector<16x128xf32> -> vector<16x128xf32>
    %104 = vector.broadcast %74 : vector<1x128xf32> to vector<16x128xf32>
    %105 = arith.addf %103, %104 : vector<16x128xf32>
    %106 = arith.addf %105, %33 : vector<16x128xf32>
    %c1_53 = arith.constant 1 : index
    %c0_54 = arith.constant 0 : index
    %c0_55 = arith.constant 0 : index
    %107 = vector.load %arg6[%c1_53, %c0_54, %c0_55] : memref<2x6x128xf32, #tpu.memory_space<vmem>>, vector<1x6x128xf32>
    %108 = vector.shape_cast %107 : vector<1x6x128xf32> to vector<6x128xf32>
    %109 = arith.truncf %106 : vector<16x128xf32> to vector<16x128xbf16>
    %c1_56 = arith.constant 1 : index
    %c0_57 = arith.constant 0 : index
    %c0_58 = arith.constant 0 : index
    %110 = vector.load %arg12[%c1_56, %c0_57, %c0_58] : memref<2x128x128xbf16, #tpu.memory_space<vmem>>, vector<1x128x128xbf16>
    %111 = vector.shape_cast %110 : vector<1x128x128xbf16> to vector<128x128xbf16>
    %cst_59 = arith.constant dense<0.000000e+00> : vector<16x128xf32>
    %112 = tpu.matmul %109, %111, %cst_59 {dimension_numbers = #tpu.dot_dimension_numbers<[1], [0], [0], [1], [0, 0, 1, 1], [], []>} : vector<16x128xbf16>, vector<128x128xbf16>, vector<16x128xf32> -> vector<16x128xf32>
    %113 = vector.extract_strided_slice %108 {offsets = [0, 0], sizes = [1, 128], strides = [1, 1]} : vector<6x128xf32> to vector<1x128xf32>
    %114 = vector.broadcast %113 : vector<1x128xf32> to vector<16x128xf32>
    %115 = arith.addf %112, %114 : vector<16x128xf32>
    %c1_60 = arith.constant 1 : index
    %c0_61 = arith.constant 0 : index
    %c0_62 = arith.constant 0 : index
    %116 = vector.load %arg13[%c1_60, %c0_61, %c0_62] : memref<2x128x128xbf16, #tpu.memory_space<vmem>>, vector<1x128x128xbf16>
    %117 = vector.shape_cast %116 : vector<1x128x128xbf16> to vector<128x128xbf16>
    %c1_63 = arith.constant 1 : index
    %c0_64 = arith.constant 0 : index
    %c0_65 = arith.constant 0 : index
    %118 = vector.load %arg14[%c1_63, %c0_64, %c0_65] : memref<2x128x128xbf16, #tpu.memory_space<vmem>>, vector<1x128x128xbf16>
    %119 = vector.shape_cast %118 : vector<1x128x128xbf16> to vector<128x128xbf16>
    %c1_66 = arith.constant 1 : index
    %c0_67 = arith.constant 0 : index
    %c0_68 = arith.constant 0 : index
    %120 = vector.load %arg7[%c1_66, %c0_67, %c0_68] : memref<2x1x128xf32, #tpu.memory_space<vmem>>, vector<1x1x128xf32>
    %121 = vector.shape_cast %120 : vector<1x1x128xf32> to vector<1x128xf32>
    %122 = vector.extract_strided_slice %108 {offsets = [1, 0], sizes = [1, 128], strides = [1, 1]} : vector<6x128xf32> to vector<1x128xf32>
    %123 = vector.broadcast %122 : vector<1x128xf32> to vector<16x128xf32>
    %124 = arith.mulf %115, %123 : vector<16x128xf32>
    %125 = vector.extract_strided_slice %108 {offsets = [2, 0], sizes = [1, 128], strides = [1, 1]} : vector<6x128xf32> to vector<1x128xf32>
    %126 = vector.broadcast %125 : vector<1x128xf32> to vector<16x128xf32>
    %127 = arith.addf %124, %126 : vector<16x128xf32>
    %cst_69 = arith.constant 0.000000e+00 : f32
    %128 = vector.broadcast %cst_69 : f32 to vector<16x128xf32>
    %129 = arith.cmpf oge, %127, %128 : vector<16x128xf32>
    %cst_70 = arith.constant 0.00999999977 : f32
    %130 = vector.broadcast %cst_70 : f32 to vector<16x128xf32>
    %131 = arith.mulf %130, %127 : vector<16x128xf32>
    %132 = arith.select %129, %127, %131 : vector<16x128xi1>, vector<16x128xf32>
    %133 = arith.truncf %132 : vector<16x128xf32> to vector<16x128xbf16>
    %cst_71 = arith.constant dense<0.000000e+00> : vector<16x128xf32>
    %134 = tpu.matmul %133, %117, %cst_71 {dimension_numbers = #tpu.dot_dimension_numbers<[1], [0], [0], [1], [0, 0, 1, 1], [], []>} : vector<16x128xbf16>, vector<128x128xbf16>, vector<16x128xf32> -> vector<16x128xf32>
    %135 = vector.extract_strided_slice %108 {offsets = [3, 0], sizes = [1, 128], strides = [1, 1]} : vector<6x128xf32> to vector<1x128xf32>
    %136 = vector.broadcast %135 : vector<1x128xf32> to vector<16x128xf32>
    %137 = arith.addf %134, %136 : vector<16x128xf32>
    %138 = vector.extract_strided_slice %108 {offsets = [4, 0], sizes = [1, 128], strides = [1, 1]} : vector<6x128xf32> to vector<1x128xf32>
    %139 = vector.broadcast %138 : vector<1x128xf32> to vector<16x128xf32>
    %140 = arith.mulf %137, %139 : vector<16x128xf32>
    %141 = vector.extract_strided_slice %108 {offsets = [5, 0], sizes = [1, 128], strides = [1, 1]} : vector<6x128xf32> to vector<1x128xf32>
    %142 = vector.broadcast %141 : vector<1x128xf32> to vector<16x128xf32>
    %143 = arith.addf %140, %142 : vector<16x128xf32>
    %cst_72 = arith.constant 0.000000e+00 : f32
    %144 = vector.broadcast %cst_72 : f32 to vector<16x128xf32>
    %145 = arith.cmpf oge, %143, %144 : vector<16x128xf32>
    %cst_73 = arith.constant 0.00999999977 : f32
    %146 = vector.broadcast %cst_73 : f32 to vector<16x128xf32>
    %147 = arith.mulf %146, %143 : vector<16x128xf32>
    %148 = arith.select %145, %143, %147 : vector<16x128xi1>, vector<16x128xf32>
    %149 = arith.truncf %148 : vector<16x128xf32> to vector<16x128xbf16>
    %cst_74 = arith.constant dense<0.000000e+00> : vector<16x128xf32>
    %150 = tpu.matmul %149, %119, %cst_74 {dimension_numbers = #tpu.dot_dimension_numbers<[1], [0], [0], [1], [0, 0, 1, 1], [], []>} : vector<16x128xbf16>, vector<128x128xbf16>, vector<16x128xf32> -> vector<16x128xf32>
    %151 = vector.broadcast %121 : vector<1x128xf32> to vector<16x128xf32>
    %152 = arith.addf %150, %151 : vector<16x128xf32>
    %153 = arith.addf %152, %106 : vector<16x128xf32>
    %154 = vector.extract_strided_slice %63 {offsets = [0, 0], sizes = [16, 64], strides = [1, 1]} : vector<16x128xf32> to vector<16x64xf32>
    %155 = vector.extract_strided_slice %153 {offsets = [0, 0], sizes = [16, 64], strides = [1, 1]} : vector<16x128xf32> to vector<16x64xf32>
    %156 = arith.mulf %0, %154 : vector<16x64xf32>
    %cst_75 = arith.constant 1.000000e+00 : f32
    %157 = vector.broadcast %cst_75 : f32 to vector<16x64xf32>
    %158 = arith.subf %157, %154 : vector<16x64xf32>
    %159 = arith.mulf %155, %158 : vector<16x64xf32>
    %160 = arith.addf %156, %159 : vector<16x64xf32>
    %c0_76 = arith.constant 0 : index
    %c0_77 = arith.constant 0 : index
    %161 = vector.load %arg15[%c0_76, %c0_77] : memref<16x64xf32, #tpu.memory_space<vmem>>, vector<16x64xf32>
    tpu.vector_store %arg15[%c0_76, %c0_77], %160 {strides = array<i32>} : memref<16x64xf32, #tpu.memory_space<vmem>>, vector<16x64xf32>,
    return
  }
  func.func @transform_0(%arg0: i32) -> (i32, i32) {
    %c0_i32 = arith.constant 0 : i32
    %c0_i32_0 = arith.constant 0 : i32
    return %arg0, %c0_i32 : i32, i32
  }
  func.func @transform_1(%arg0: i32) -> (i32, i32) {
    %c0_i32 = arith.constant 0 : i32
    %c0_i32_0 = arith.constant 0 : i32
    return %arg0, %c0_i32 : i32, i32
  }
  func.func @transform_2(%arg0: i32) -> (i32, i32) {
    %c0_i32 = arith.constant 0 : i32
    %c0_i32_0 = arith.constant 0 : i32
    %c0_i32_1 = arith.constant 0 : i32
    return %c0_i32, %c0_i32_0 : i32, i32
  }
  func.func @transform_3(%arg0: i32) -> (i32, i32) {
    %c0_i32 = arith.constant 0 : i32
    %c0_i32_0 = arith.constant 0 : i32
    %c0_i32_1 = arith.constant 0 : i32
    return %c0_i32, %c0_i32_0 : i32, i32
  }
  func.func @transform_4(%arg0: i32) -> (i32, i32) {
    %c0_i32 = arith.constant 0 : i32
    %c0_i32_0 = arith.constant 0 : i32
    %c0_i32_1 = arith.constant 0 : i32
    return %c0_i32, %c0_i32_0 : i32, i32
  }
  func.func @transform_5(%arg0: i32) -> (i32, i32, i32) {
    %c0_i32 = arith.constant 0 : i32
    %c0_i32_0 = arith.constant 0 : i32
    %c0_i32_1 = arith.constant 0 : i32
    %c0_i32_2 = arith.constant 0 : i32
    return %c0_i32, %c0_i32_0, %c0_i32_1 : i32, i32, i32
  }
  func.func @transform_6(%arg0: i32) -> (i32, i32, i32) {
    %c0_i32 = arith.constant 0 : i32
    %c0_i32_0 = arith.constant 0 : i32
    %c0_i32_1 = arith.constant 0 : i32
    %c0_i32_2 = arith.constant 0 : i32
    return %c0_i32, %c0_i32_0, %c0_i32_1 : i32, i32, i32
  }
  func.func @transform_7(%arg0: i32) -> (i32, i32) {
    %c0_i32 = arith.constant 0 : i32
    %c0_i32_0 = arith.constant 0 : i32
    %c0_i32_1 = arith.constant 0 : i32
    return %c0_i32, %c0_i32_0 : i32, i32
  }
  func.func @transform_8(%arg0: i32) -> (i32, i32) {
    %c0_i32 = arith.constant 0 : i32
    %c0_i32_0 = arith.constant 0 : i32
    %c0_i32_1 = arith.constant 0 : i32
    return %c0_i32, %c0_i32_0 : i32, i32
  }
  func.func @transform_9(%arg0: i32) -> (i32, i32) {
    %c0_i32 = arith.constant 0 : i32
    %c0_i32_0 = arith.constant 0 : i32
    %c0_i32_1 = arith.constant 0 : i32
    return %c0_i32, %c0_i32_0 : i32, i32
  }
  func.func @transform_10(%arg0: i32) -> (i32, i32) {
    %c0_i32 = arith.constant 0 : i32
    %c0_i32_0 = arith.constant 0 : i32
    %c0_i32_1 = arith.constant 0 : i32
    return %c0_i32, %c0_i32_0 : i32, i32
  }
  func.func @transform_11(%arg0: i32) -> (i32, i32, i32) {
    %c0_i32 = arith.constant 0 : i32
    %c0_i32_0 = arith.constant 0 : i32
    %c0_i32_1 = arith.constant 0 : i32
    %c0_i32_2 = arith.constant 0 : i32
    return %c0_i32, %c0_i32_0, %c0_i32_1 : i32, i32, i32
  }
  func.func @transform_12(%arg0: i32) -> (i32, i32, i32) {
    %c0_i32 = arith.constant 0 : i32
    %c0_i32_0 = arith.constant 0 : i32
    %c0_i32_1 = arith.constant 0 : i32
    %c0_i32_2 = arith.constant 0 : i32
    return %c0_i32, %c0_i32_0, %c0_i32_1 : i32, i32, i32
  }
  func.func @transform_13(%arg0: i32) -> (i32, i32, i32) {
    %c0_i32 = arith.constant 0 : i32
    %c0_i32_0 = arith.constant 0 : i32
    %c0_i32_1 = arith.constant 0 : i32
    %c0_i32_2 = arith.constant 0 : i32
    return %c0_i32, %c0_i32_0, %c0_i32_1 : i32, i32, i32
  }
  func.func @transform_14(%arg0: i32) -> (i32, i32) {
    %c0_i32 = arith.constant 0 : i32
    %c0_i32_0 = arith.constant 0 : i32
    return %arg0, %c0_i32 : i32, i32
  }
}

</mosaic_0001>

<llo_original>
// kernel: forward.1
$region0: #{forward.1}
  #allocation0 [shape = 'u32[]', space=smem, size = 0x4, offset = 0x4, fixed_abs, tag = 'smem constant byte address 0x4 - core index']
  #allocation1 [shape = 'u32[144,128]{1,0:T(1,128)}', space=vmem, size = 0x12000, scoped, tag = 'internal scratch']
  %s0 = inlined_call_operand.hbm [shape: f32[16,64], index: 0, kind: input, shape index: {}]
  %s1 = inlined_call_operand.hbm [shape: f32[16,32], index: 1, kind: input, shape index: {}]
  %s2 = inlined_call_operand.hbm [shape: f32[2,64], index: 2, kind: input, shape index: {}]
  %s3 = inlined_call_operand.hbm [shape: f32[2,32], index: 3, kind: input, shape index: {}]
  %s4 = inlined_call_operand.vmem [shape: f32[5,128], index: 4, kind: input, shape index: {}]
  %s5 = inlined_call_operand.vmem [shape: f32[2,6,128], index: 5, kind: input, shape index: {}]
  %s6 = inlined_call_operand.hbm [shape: f32[2,1,128], index: 6, kind: input, shape index: {}]
  %s7 = inlined_call_operand.vmem [shape: bf16[64,128], index: 7, kind: input, shape index: {}]
  %s8 = inlined_call_operand.hbm [shape: bf16[32,128], index: 8, kind: input, shape index: {}]
  %s9 = inlined_call_operand.hbm [shape: bf16[128,256], index: 9, kind: input, shape index: {}]
  %s10 = inlined_call_operand.hbm [shape: bf16[128,128], index: 10, kind: input, shape index: {}]
  %s11 = inlined_call_operand.hbm [shape: bf16[2,128,128], index: 11, kind: input, shape index: {}]
  %s12 = inlined_call_operand.hbm [shape: bf16[2,128,128], index: 12, kind: input, shape index: {}]
  %s13 = inlined_call_operand.hbm [shape: bf16[2,128,128], index: 13, kind: input, shape index: {}]
  %s14 = inlined_call_operand.hbm [shape: f32[16,64], index: 14, kind: output, shape index: {}]
  %s15 = sld [smem:[#allocation0]]
  $region110: #{forward.1} parent=0
    _
  %s17 = ssub.s32 1, %s15
  %s18 = scalar_select 0, %s17, %s15
  $region1: #{forward.1} parent=0
    #allocation2 [shape = 'u8[8192]{0}', space=vmem, size = 0x2000, scoped, tag = 'input window, operand 0, single buffered']
    #allocation3 [shape = 's32[1]{0}', space=sflag, size = 0x4, scoped, tag = 'scoped memory for forward.1']
    #allocation4 [shape = 's32[1]{0}', space=sflag, size = 0x4, scoped, tag = 'scoped memory for forward.1']
    #allocation5 [shape = 'u8[8192]{0}', space=vmem, size = 0x2000, scoped, tag = 'input window, operand 1, single buffered']
    #allocation6 [shape = 's32[1]{0}', space=sflag, size = 0x4, scoped, tag = 'scoped memory for forward.1']
    #allocation7 [shape = 'u8[1024]{0}', space=vmem, size = 0x400, scoped, tag = 'input window, operand 2, single buffered']
    #allocation8 [shape = 'u8[1024]{0}', space=vmem, size = 0x400, scoped, tag = 'input window, operand 3, single buffered']
    #allocation9 [shape = 's32[1]{0}', space=sflag, size = 0x4, scoped, tag = 'scoped memory for forward.1']
    #allocation10 [shape = 'u8[1024]{0}', space=vmem, size = 0x400, scoped, tag = 'input window, operand 6, single buffered']
    #allocation11 [shape = 'u8[8192]{0}', space=vmem, size = 0x2000, scoped, tag = 'input window, operand 8, single buffered']
    #allocation12 [shape = 's32[1]{0}', space=sflag, size = 0x4, scoped, tag = 'scoped memory for forward.1']
    #allocation13 [shape = 'u8[65536]{0}', space=vmem, size = 0x10000, scoped, tag = 'input window, operand 9, single buffered']
    #allocation14 [shape = 'u8[32768]{0}', space=vmem, size = 0x8000, scoped, tag = 'input window, operand 10, single buffered']
    #allocation15 [shape = 's32[1]{0}', space=sflag, size = 0x4, scoped, tag = 'scoped memory for forward.1']
    #allocation16 [shape = 'u8[65536]{0}', space=vmem, size = 0x10000, scoped, tag = 'input window, operand 11, single buffered']
    #allocation17 [shape = 'u8[65536]{0}', space=vmem, size = 0x10000, scoped, tag = 'input window, operand 12, single buffered']
    #allocation18 [shape = 's32[1]{0}', space=sflag, size = 0x4, scoped, tag = 'scoped memory for forward.1']
    #allocation19 [shape = 'u8[65536]{0}', space=vmem, size = 0x10000, scoped, tag = 'input window, operand 13, single buffered']
    #allocation20 [shape = 'u8[8192]{0}', space=vmem, size = 0x2000, scoped, tag = 'output window, operand 0, single buffered']
    %19 = vsyncpa [#allocation3], 0
    %20 = vsyncpa [#allocation6], 0
    %21 = vsyncpa [#allocation9], 0
    %22 = vsyncpa [#allocation12], 0
    %23 = vsyncpa [#allocation15], 0
    %24 = vsyncpa [#allocation18], 0
    %25 = vsyncpa [#allocation4], 0
    // Predicated region
    $region2: #{forward.1} parent=1 // pred_check
      _
    $region3: #{forward.1} parent=1 // pred_check_branch
      %27 = sbr.rel (0) target = $region5
    $region4: #{forward.1} parent=1 // pred_region
      %s29 = ssub.s32 256, 256
      %30 = vsyncadd [#allocation3], %s29
      %s31 = sshll.u32 [#allocation2], 4
      %s32 = int_to_ptr.vmem [resolvable:$true] %s31
      %37 = dma.hbm_to_vmem [thread:$0]  %s0, 256, %s32, [#allocation3], 128, 128, 8
    $region5: #{forward.1} parent=1 // pred_fallthru
      _
    // Predicated region
    $region6: #{forward.1} parent=1 // pred_check
      _
    $region7: #{forward.1} parent=1 // pred_check_branch
      %39 = sbr.rel (0) target = $region9
    $region8: #{forward.1} parent=1 // pred_region
      %s41 = ssub.s32 256, 256
      %42 = vsyncadd [#allocation6], %s41
      %s43 = sshll.u32 [#allocation5], 4
      %s44 = int_to_ptr.vmem [resolvable:$true] %s43
      %49 = dma.hbm_to_vmem [thread:$0]  %s1, 256, %s44, [#allocation6], 128, 128, 8
    $region9: #{forward.1} parent=1 // pred_fallthru
      _
    // Predicated region
    $region10: #{forward.1} parent=1 // pred_check
      _
    $region11: #{forward.1} parent=1 // pred_check_branch
      %51 = sbr.rel (0) target = $region13
    $region12: #{forward.1} parent=1 // pred_region
      %s53 = ssub.s32 32, 32
      %54 = vsyncadd [#allocation6], %s53
      %s56 = sshll.u32 [#allocation7], 4
      %s57 = int_to_ptr.vmem [resolvable:$true] %s56
      %59 = dma.hbm_to_vmem [thread:$0]  %s2, 32, %s57, [#allocation6]
    $region13: #{forward.1} parent=1 // pred_fallthru
      _
    // Predicated region
    $region14: #{forward.1} parent=1 // pred_check
      _
    $region15: #{forward.1} parent=1 // pred_check_branch
      %61 = sbr.rel (0) target = $region17
    $region16: #{forward.1} parent=1 // pred_region
      %s63 = ssub.s32 32, 32
      %64 = vsyncadd [#allocation9], %s63
      %s66 = sshll.u32 [#allocation8], 4
      %s67 = int_to_ptr.vmem [resolvable:$true] %s66
      %69 = dma.hbm_to_vmem [thread:$0]  %s3, 32, %s67, [#allocation9]
    $region17: #{forward.1} parent=1 // pred_fallthru
      _
    // Predicated region
    $region18: #{forward.1} parent=1 // pred_check
      _
    $region19: #{forward.1} parent=1 // pred_check_branch
      %71 = sbr.rel (0) target = $region21
    $region20: #{forward.1} parent=1 // pred_region
      _
    $region21: #{forward.1} parent=1 // pred_fallthru
      _
    // Predicated region
    $region22: #{forward.1} parent=1 // pred_check
      _
    $region23: #{forward.1} parent=1 // pred_check_branch
      %73 = sbr.rel (0) target = $region25
    $region24: #{forward.1} parent=1 // pred_region
      _
    $region25: #{forward.1} parent=1 // pred_fallthru
      _
    // Predicated region
    $region26: #{forward.1} parent=1 // pred_check
      _
    $region27: #{forward.1} parent=1 // pred_check_branch
      %75 = sbr.rel (0) target = $region29
    $region28: #{forward.1} parent=1 // pred_region
      %s77 = ssub.s32 32, 32
      %78 = vsyncadd [#allocation9], %s77
      %s79 = sshll.u32 [#allocation10], 4
      %s80 = int_to_ptr.vmem [resolvable:$true] %s79
      %85 = dma.hbm_to_vmem [thread:$0]  %s6, 32, %s80, [#allocation9], 16, 16, 1
    $region29: #{forward.1} parent=1 // pred_fallthru
      _
    // Predicated region
    $region30: #{forward.1} parent=1 // pred_check
      _
    $region31: #{forward.1} parent=1 // pred_check_branch
      %87 = sbr.rel (0) target = $region33
    $region32: #{forward.1} parent=1 // pred_region
      _
    $region33: #{forward.1} parent=1 // pred_fallthru
      _
    // Predicated region
    $region34: #{forward.1} parent=1 // pred_check
      _
    $region35: #{forward.1} parent=1 // pred_check_branch
      %89 = sbr.rel (0) target = $region37
    $region36: #{forward.1} parent=1 // pred_region
      %s91 = ssub.s32 256, 256
      %92 = vsyncadd [#allocation12], %s91
      %s93 = sshll.u32 [#allocation11], 4
      %s94 = int_to_ptr.vmem [resolvable:$true] %s93
      %99 = dma.hbm_to_vmem [thread:$0]  %s8, 256, %s94, [#allocation12], 64, 64, 4
    $region37: #{forward.1} parent=1 // pred_fallthru
      _
    // Predicated region
    $region38: #{forward.1} parent=1 // pred_check
      _
    $region39: #{forward.1} parent=1 // pred_check_branch
      %101 = sbr.rel (0) target = $region41
    $region40: #{forward.1} parent=1 // pred_region
      %s103 = ssub.s32 2048, 2048
      %104 = vsyncadd [#allocation12], %s103
      %s105 = sshll.u32 [#allocation13], 4
      %s106 = int_to_ptr.vmem [resolvable:$true] %s105
      %111 = dma.hbm_to_vmem [thread:$0]  %s9, 2048, %s106, [#allocation12], 128, 128, 8
    $region41: #{forward.1} parent=1 // pred_fallthru
      _
    // Predicated region
    $region42: #{forward.1} parent=1 // pred_check
      _
    $region43: #{forward.1} parent=1 // pred_check_branch
      %113 = sbr.rel (0) target = $region45
    $region44: #{forward.1} parent=1 // pred_region
      %s115 = ssub.s32 1024, 1024
      %116 = vsyncadd [#allocation15], %s115
      %s117 = sshll.u32 [#allocation14], 4
      %s118 = int_to_ptr.vmem [resolvable:$true] %s117
      %123 = dma.hbm_to_vmem [thread:$0]  %s10, 1024, %s118, [#allocation15], 64, 64, 4
    $region45: #{forward.1} parent=1 // pred_fallthru
      _
    // Predicated region
    $region46: #{forward.1} parent=1 // pred_check
      _
    $region47: #{forward.1} parent=1 // pred_check_branch
      %125 = sbr.rel (0) target = $region49
    $region48: #{forward.1} parent=1 // pred_region
      %s127 = ssub.s32 2048, 2048
      %128 = vsyncadd [#allocation15], %s127
      %s129 = sshll.u32 [#allocation16], 4
      %s130 = int_to_ptr.vmem [resolvable:$true] %s129
      %135 = dma.hbm_to_vmem [thread:$0]  %s11, 2048, %s130, [#allocation15], 64, 64, 4
    $region49: #{forward.1} parent=1 // pred_fallthru
      _
    // Predicated region
    $region50: #{forward.1} parent=1 // pred_check
      _
    $region51: #{forward.1} parent=1 // pred_check_branch
      %137 = sbr.rel (0) target = $region53
    $region52: #{forward.1} parent=1 // pred_region
      %s139 = ssub.s32 2048, 2048
      %140 = vsyncadd [#allocation18], %s139
      %s141 = sshll.u32 [#allocation17], 4
      %s142 = int_to_ptr.vmem [resolvable:$true] %s141
      %147 = dma.hbm_to_vmem [thread:$0]  %s12, 2048, %s142, [#allocation18], 64, 64, 4
    $region53: #{forward.1} parent=1 // pred_fallthru
      _
    // Predicated region
    $region54: #{forward.1} parent=1 // pred_check
      _
    $region55: #{forward.1} parent=1 // pred_check_branch
      %149 = sbr.rel (0) target = $region57
    $region56: #{forward.1} parent=1 // pred_region
      %s151 = ssub.s32 2048, 2048
      %152 = vsyncadd [#allocation18], %s151
      %s153 = sshll.u32 [#allocation19], 4
      %s154 = int_to_ptr.vmem [resolvable:$true] %s153
      %159 = dma.hbm_to_vmem [thread:$0]  %s13, 2048, %s154, [#allocation18], 64, 64, 4
    $region57: #{forward.1} parent=1 // pred_fallthru
      _
    // Predicated region
    $region58: #{forward.1} parent=1 // pred_check
      _
    $region59: #{forward.1} parent=1 // pred_check_branch
      %161 = sbr.rel (0) target = $region61
    $region60: #{forward.1} parent=1 // pred_region
      %162 = dma.done [#allocation3], 256
    $region61: #{forward.1} parent=1 // pred_fallthru
      _
    // Predicated region
    $region62: #{forward.1} parent=1 // pred_check
      _
    $region63: #{forward.1} parent=1 // pred_check_branch
      %164 = sbr.rel (0) target = $region65
    $region64: #{forward.1} parent=1 // pred_region
      %165 = dma.done [#allocation6], 256
    $region65: #{forward.1} parent=1 // pred_fallthru
      _
    // Predicated region
    $region66: #{forward.1} parent=1 // pred_check
      _
    $region67: #{forward.1} parent=1 // pred_check_branch
      %167 = sbr.rel (0) target = $region69
    $region68: #{forward.1} parent=1 // pred_region
      %168 = dma.done [#allocation6], 32
    $region69: #{forward.1} parent=1 // pred_fallthru
      _
    // Predicated region
    $region70: #{forward.1} parent=1 // pred_check
      _
    $region71: #{forward.1} parent=1 // pred_check_branch
      %170 = sbr.rel (0) target = $region73
    $region72: #{forward.1} parent=1 // pred_region
      %171 = dma.done [#allocation9], 32
    $region73: #{forward.1} parent=1 // pred_fallthru
      _
    // Predicated region
    $region74: #{forward.1} parent=1 // pred_check
      _
    $region75: #{forward.1} parent=1 // pred_check_branch
      %173 = sbr.rel (0) target = $region77
    $region76: #{forward.1} parent=1 // pred_region
      %174 = dma.done [#allocation9], 32
    $region77: #{forward.1} parent=1 // pred_fallthru
      _
    // Predicated region
    $region78: #{forward.1} parent=1 // pred_check
      _
    $region79: #{forward.1} parent=1 // pred_check_branch
      %176 = sbr.rel (0) target = $region81
    $region80: #{forward.1} parent=1 // pred_region
      %177 = dma.done [#allocation12], 256
    $region81: #{forward.1} parent=1 // pred_fallthru
      _
    // Predicated region
    $region82: #{forward.1} parent=1 // pred_check
      _
    $region83: #{forward.1} parent=1 // pred_check_branch
      %179 = sbr.rel (0) target = $region85
    $region84: #{forward.1} parent=1 // pred_region
      %180 = dma.done [#allocation12], 2048
    $region85: #{forward.1} parent=1 // pred_fallthru
      _
    // Predicated region
    $region86: #{forward.1} parent=1 // pred_check
      _
    $region87: #{forward.1} parent=1 // pred_check_branch
      %182 = sbr.rel (0) target = $region89
    $region88: #{forward.1} parent=1 // pred_region
      %183 = dma.done [#allocation15], 1024
    $region89: #{forward.1} parent=1 // pred_fallthru
      _
    // Predicated region
    $region90: #{forward.1} parent=1 // pred_check
      _
    $region91: #{forward.1} parent=1 // pred_check_branch
      %185 = sbr.rel (0) target = $region93
    $region92: #{forward.1} parent=1 // pred_region
      %186 = dma.done [#allocation15], 2048
    $region93: #{forward.1} parent=1 // pred_fallthru
      _
    // Predicated region
    $region94: #{forward.1} parent=1 // pred_check
      _
    $region95: #{forward.1} parent=1 // pred_check_branch
      %188 = sbr.rel (0) target = $region97
    $region96: #{forward.1} parent=1 // pred_region
      %189 = dma.done [#allocation18], 2048
    $region97: #{forward.1} parent=1 // pred_fallthru
      _
    // Predicated region
    $region98: #{forward.1} parent=1 // pred_check
      _
    $region99: #{forward.1} parent=1 // pred_check_branch
      %191 = sbr.rel (0) target = $region101
    $region100: #{forward.1} parent=1 // pred_region
      %192 = dma.done [#allocation18], 2048
    $region101: #{forward.1} parent=1 // pred_fallthru
      _
    %v194 = vld [vmem:[#allocation2] sm:$0xff]
    %v195 = vld [vmem:[#allocation2 + $0x8] sm:$0xff]
    %v196 = vld [vmem:[#allocation5] sm:$0xff]
    %v197 = vld [vmem:[#allocation5 + $0x8] sm:$0xff]
    %v198 = vld [vmem:[#allocation7] sm:$0x1]
    %v199 = vlaneseq
    %v200 = vshrl.u32 %v199, 7
    %v201 = vsub.s32 0, %v200
    %v202 = vrot.slane %v198, %v201
    %v203 = vmul.f32 %v194, %v202
    %v204 = vmul.f32 %v195, %v202
    %v205 = vld [vmem:[#allocation7 + $0x1] sm:$0x1]
    %v206 = vlaneseq
    %v207 = vshrl.u32 %v206, 7
    %v208 = vsub.s32 0, %v207
    %v209 = vrot.slane %v205, %v208
    %v210 = vadd.f32 %v203, %v209
    %v211 = vadd.f32 %v204, %v209
    %vm212 = vcmp.ge.f32.partialorder %v210, 0.0
    %vm213 = vcmp.ge.f32.partialorder %v211, 0.0
    %v214 = vmul.f32 %v210, 0.01
    %v215 = vmul.f32 %v211, 0.01
    %v216 = vsel %vm212, %v210, %v214
    %v217 = vsel %vm213, %v211, %v215
    %v218 = vpack.c.bf16 %v217, %v216
    %v219 = vld [vmem:[#allocation8] sm:$0x1]
    %v220 = vlaneseq
    %v221 = vshrl.u32 %v220, 7
    %v222 = vsub.s32 0, %v221
    %v223 = vrot.slane %v219, %v222
    %v224 = vmul.f32 %v196, %v223
    %v225 = vmul.f32 %v197, %v223
    %v226 = vld [vmem:[#allocation8 + $0x1] sm:$0x1]
    %v227 = vlaneseq
    %v228 = vshrl.u32 %v227, 7
    %v229 = vsub.s32 0, %v228
    %v230 = vrot.slane %v226, %v229
    %v231 = vadd.f32 %v224, %v230
    %v232 = vadd.f32 %v225, %v230
    %vm233 = vcmp.ge.f32.partialorder %v231, 0.0
    %vm234 = vcmp.ge.f32.partialorder %v232, 0.0
    %v235 = vmul.f32 %v231, 0.01
    %v236 = vmul.f32 %v232, 0.01
    %v237 = vsel %vm233, %v231, %v235
    %v238 = vsel %vm234, %v232, %v236
    %v239 = vpack.c.bf16 %v238, %v237
    %v240 = vld [vmem:[%s7] sm:$0xf]
    %v241 = vld [vmem:[%s7 + $0x4] sm:$0xf]
    %v242 = vld [vmem:[%s7 + $0x8] sm:$0xf]
    %v243 = vld [vmem:[%s7 + $0xc] sm:$0xf]
    %v244 = vld [vmem:[%s7 + $0x10] sm:$0xf]
    %v245 = vld [vmem:[%s7 + $0x14] sm:$0xf]
    %v246 = vld [vmem:[%s7 + $0x18] sm:$0xf]
    %v247 = vld [vmem:[%s7 + $0x1c] sm:$0xf]
    %v248 = vld [vmem:[#allocation11] sm:$0xf]
    %v249 = vld [vmem:[#allocation11 + $0x4] sm:$0xf]
    %v250 = vld [vmem:[#allocation11 + $0x8] sm:$0xf]
    %v251 = vld [vmem:[#allocation11 + $0xc] sm:$0xf]
    %v256 = vunpack.c.l.b16 %v248
    %v257 = vunpack.c.l.b16 %v249
    %v258 = vunpack.c.l.b16 %v250
    %v259 = vunpack.c.l.b16 %v251
    %v260 = vpack.c.b16 %v257, %v256
    %v261 = vpack.c.b16 %v259, %v258
    %vm264 = vcmask 261120
    %v266 = vsel %vm264, %v239, 0
    %268 = vmatprep.subr.bf16.mxu0 0
    %269 = vmatpush1.bf16.msra.mxu0 0
    %270 = vmatprep.subr.bf16.mxu0 0
    %271 = vmatpush1.bf16.msra.mxu0 0
    %272 = vmatprep.subr.bf16.mxu0 0
    %273 = vmatpush1.bf16.msra.mxu0 0
    %274 = vmatprep.subr.bf16.mxu0 0
    %275 = vmatpush1.bf16.msra.mxu0 0
    %276 = vmatprep.subr.bf16.mxu0 0
    %277 = vmatpush1.bf16.msra.mxu0 0
    %278 = vmatprep.subr.bf16.mxu0 0
    %279 = vmatpush1.bf16.msra.mxu0 0
    %280 = vmatprep.subr.bf16.mxu0 0
    %281 = vmatpush1.bf16.msra.mxu0 %v261
    %282 = vmatprep.subr.bf16.mxu0 0
    %283 = vmatpush1.bf16.msra.mxu0 %v260
    %284 = vmatprep.subr.bf16.mxu0 0
    %285 = vmatpush2.bf16.msra.mxu0 0
    %286 = vmatprep.subr.bf16.mxu0 0
    %287 = vmatpush2.bf16.msra.mxu0 0
    %288 = vmatprep.subr.bf16.mxu0 0
    %289 = vmatpush2.bf16.msra.mxu0 0
    %290 = vmatprep.subr.bf16.mxu0 0
    %291 = vmatpush2.bf16.msra.mxu0 0
    %292 = vmatprep.subr.bf16.mxu0 0
    %293 = vmatpush2.bf16.msra.mxu0 0
    %294 = vmatprep.subr.bf16.mxu0 0
    %295 = vmatpush2.bf16.msra.mxu0 0
    %296 = vmatprep.subr.bf16.mxu0 0
    %297 = vmatpush2.bf16.msra.mxu0 0
    %298 = vmatprep.subr.bf16.mxu0 0
    %299 = vmatpush2.bf16.msra.mxu0 0
    %300 = vmatprep.mubr.bf16.mxu0 0
    %301 = vmatmul.mubr.bf16.gmra.mxu0 %v266
    %v302 = vpop.f32.mrf.mxu0
    %v303 = vadd.f32 0.0, %v302
    %v304 = vpop.f32.mrf.mxu0
    %v305 = vpop.f32.mrf.mxu0
    %v306 = vadd.f32 0.0, %v305
    %v307 = vpop.f32.mrf.mxu0
    %308 = vdwg.mxu0
    %v317 = vunpack.c.l.b16 %v240
    %v318 = vunpack.c.l.b16 %v241
    %v319 = vunpack.c.l.b16 %v242
    %v320 = vunpack.c.l.b16 %v243
    %v321 = vunpack.c.l.b16 %v244
    %v322 = vunpack.c.l.b16 %v245
    %v323 = vunpack.c.l.b16 %v246
    %v324 = vunpack.c.l.b16 %v247
    %v325 = vpack.c.b16 %v318, %v317
    %v326 = vpack.c.b16 %v320, %v319
    %v327 = vpack.c.b16 %v322, %v321
    %v328 = vpack.c.b16 %v324, %v323
    %vm333 = vcmask 523264
    %v335 = vsel %vm333, %v218, 0
    %337 = vmatprep.subr.bf16.mxu0 0
    %338 = vmatpush1.bf16.msra.mxu0 0
    %339 = vmatprep.subr.bf16.mxu0 0
    %340 = vmatpush1.bf16.msra.mxu0 0
    %341 = vmatprep.subr.bf16.mxu0 0
    %342 = vmatpush1.bf16.msra.mxu0 0
    %343 = vmatprep.subr.bf16.mxu0 0
    %344 = vmatpush1.bf16.msra.mxu0 0
    %345 = vmatprep.subr.bf16.mxu0 0
    %346 = vmatpush1.bf16.msra.mxu0 %v328
    %347 = vmatprep.subr.bf16.mxu0 0
    %348 = vmatpush1.bf16.msra.mxu0 %v327
    %349 = vmatprep.subr.bf16.mxu0 0
    %350 = vmatpush1.bf16.msra.mxu0 %v326
    %351 = vmatprep.subr.bf16.mxu0 0
    %352 = vmatpush1.bf16.msra.mxu0 %v325
    %353 = vmatprep.subr.bf16.mxu0 0
    %354 = vmatpush2.bf16.msra.mxu0 0
    %355 = vmatprep.subr.bf16.mxu0 0
    %356 = vmatpush2.bf16.msra.mxu0 0
    %357 = vmatprep.subr.bf16.mxu0 0
    %358 = vmatpush2.bf16.msra.mxu0 0
    %359 = vmatprep.subr.bf16.mxu0 0
    %360 = vmatpush2.bf16.msra.mxu0 0
    %361 = vmatprep.subr.bf16.mxu0 0
    %362 = vmatpush2.bf16.msra.mxu0 0
    %363 = vmatprep.subr.bf16.mxu0 0
    %364 = vmatpush2.bf16.msra.mxu0 0
    %365 = vmatprep.subr.bf16.mxu0 0
    %366 = vmatpush2.bf16.msra.mxu0 0
    %367 = vmatprep.subr.bf16.mxu0 0
    %368 = vmatpush2.bf16.msra.mxu0 0
    %369 = vmatprep.mubr.bf16.mxu0 0
    %370 = vmatmul.mubr.bf16.gmra.mxu0 %v335
    %v371 = vpop.f32.mrf.mxu0
    %v372 = vadd.f32 %v303, %v371
    %v373 = vpop.f32.mrf.mxu0
    %v374 = vpop.f32.mrf.mxu0
    %v375 = vadd.f32 %v306, %v374
    %v376 = vpop.f32.mrf.mxu0
    %377 = vdwg.mxu0
    %v378 = vld [vmem:[%s4] sm:$0x1]
    %v379 = vlaneseq
    %v380 = vshrl.u32 %v379, 7
    %v381 = vsub.s32 0, %v380
    %v382 = vrot.slane %v378, %v381
    %v383 = vadd.f32 %v372, %v382
    %v384 = vadd.f32 %v375, %v382
    %v385 = vpack.c.bf16 %v384, %v383
    %v386 = vld [vmem:[#allocation13] sm:$0xff]
    %v387 = vld [vmem:[#allocation13 + $0x8] sm:$0xff]
    %v388 = vld [vmem:[#allocation13 + $0x10] sm:$0xff]
    %v389 = vld [vmem:[#allocation13 + $0x18] sm:$0xff]
    %v390 = vld [vmem:[#allocation13 + $0x20] sm:$0xff]
    %v391 = vld [vmem:[#allocation13 + $0x28] sm:$0xff]
    %v392 = vld [vmem:[#allocation13 + $0x30] sm:$0xff]
    %v393 = vld [vmem:[#allocation13 + $0x38] sm:$0xff]
    %v394 = vld [vmem:[#allocation13 + $0x40] sm:$0xff]
    %v395 = vld [vmem:[#allocation13 + $0x48] sm:$0xff]
    %v396 = vld [vmem:[#allocation13 + $0x50] sm:$0xff]
    %v397 = vld [vmem:[#allocation13 + $0x58] sm:$0xff]
    %v398 = vld [vmem:[#allocation13 + $0x60] sm:$0xff]
    %v399 = vld [vmem:[#allocation13 + $0x68] sm:$0xff]
    %v400 = vld [vmem:[#allocation13 + $0x70] sm:$0xff]
    %v401 = vld [vmem:[#allocation13 + $0x78] sm:$0xff]
    %v418 = vunpack.c.l.b16 %v386
    %v419 = vunpack.c.h.b16 %v386
    %v420 = vunpack.c.l.b16 %v387
    %v421 = vunpack.c.h.b16 %v387
    %v422 = vunpack.c.l.b16 %v388
    %v423 = vunpack.c.h.b16 %v388
    %v424 = vunpack.c.l.b16 %v389
    %v425 = vunpack.c.h.b16 %v389
    %v426 = vunpack.c.l.b16 %v390
    %v427 = vunpack.c.h.b16 %v390
    %v428 = vunpack.c.l.b16 %v391
    %v429 = vunpack.c.h.b16 %v391
    %v430 = vunpack.c.l.b16 %v392
    %v431 = vunpack.c.h.b16 %v392
    %v432 = vunpack.c.l.b16 %v393
    %v433 = vunpack.c.h.b16 %v393
    %v434 = vunpack.c.l.b16 %v394
    %v435 = vunpack.c.h.b16 %v394
    %v436 = vunpack.c.l.b16 %v395
    %v437 = vunpack.c.h.b16 %v395
    %v438 = vunpack.c.l.b16 %v396
    %v439 = vunpack.c.h.b16 %v396
    %v440 = vunpack.c.l.b16 %v397
    %v441 = vunpack.c.h.b16 %v397
    %v442 = vunpack.c.l.b16 %v398
    %v443 = vunpack.c.h.b16 %v398
    %v444 = vunpack.c.l.b16 %v399
    %v445 = vunpack.c.h.b16 %v399
    %v446 = vunpack.c.l.b16 %v400
    %v447 = vunpack.c.h.b16 %v400
    %v448 = vunpack.c.l.b16 %v401
    %v449 = vunpack.c.h.b16 %v401
    %v450 = vpack.c.b16 %v420, %v418
    %v451 = vpack.c.b16 %v421, %v419
    %v452 = vpack.c.b16 %v424, %v422
    %v453 = vpack.c.b16 %v425, %v423
    %v454 = vpack.c.b16 %v428, %v426
    %v455 = vpack.c.b16 %v429, %v427
    %v456 = vpack.c.b16 %v432, %v430
    %v457 = vpack.c.b16 %v433, %v431
    %v458 = vpack.c.b16 %v436, %v434
    %v459 = vpack.c.b16 %v437, %v435
    %v460 = vpack.c.b16 %v440, %v438
    %v461 = vpack.c.b16 %v441, %v439
    %v462 = vpack.c.b16 %v444, %v442
    %v463 = vpack.c.b16 %v445, %v443
    %v464 = vpack.c.b16 %v448, %v446
    %v465 = vpack.c.b16 %v449, %v447
    %482 = vmatprep.subr.bf16.mxu0 %v465
    %483 = vmatpush1.bf16.msra.mxu0 %v464
    %484 = vmatprep.subr.bf16.mxu0 %v463
    %485 = vmatpush1.bf16.msra.mxu0 %v462
    %486 = vmatprep.subr.bf16.mxu0 %v461
    %487 = vmatpush1.bf16.msra.mxu0 %v460
    %488 = vmatprep.subr.bf16.mxu0 %v459
    %489 = vmatpush1.bf16.msra.mxu0 %v458
    %490 = vmatprep.subr.bf16.mxu0 %v457
    %491 = vmatpush1.bf16.msra.mxu0 %v456
    %492 = vmatprep.subr.bf16.mxu0 %v455
    %493 = vmatpush1.bf16.msra.mxu0 %v454
    %494 = vmatprep.subr.bf16.mxu0 %v453
    %495 = vmatpush1.bf16.msra.mxu0 %v452
    %496 = vmatprep.subr.bf16.mxu0 %v451
    %497 = vmatpush1.bf16.msra.mxu0 %v450
    %498 = vmatprep.subr.bf16.mxu0 0
    %499 = vmatpush2.bf16.msra.mxu0 0
    %500 = vmatprep.subr.bf16.mxu0 0
    %501 = vmatpush2.bf16.msra.mxu0 0
    %502 = vmatprep.subr.bf16.mxu0 0
    %503 = vmatpush2.bf16.msra.mxu0 0
    %504 = vmatprep.subr.bf16.mxu0 0
    %505 = vmatpush2.bf16.msra.mxu0 0
    %506 = vmatprep.subr.bf16.mxu0 0
    %507 = vmatpush2.bf16.msra.mxu0 0
    %508 = vmatprep.subr.bf16.mxu0 0
    %509 = vmatpush2.bf16.msra.mxu0 0
    %510 = vmatprep.subr.bf16.mxu0 0
    %511 = vmatpush2.bf16.msra.mxu0 0
    %512 = vmatprep.subr.bf16.mxu0 0
    %513 = vmatpush2.bf16.msra.mxu0 0
    %514 = vmatprep.mubr.bf16.mxu0 0
    %515 = vmatmul.mubr.bf16.gmra.mxu0 %v385
    %v516 = vpop.f32.mrf.mxu0
    %v517 = vadd.f32 0.0, %v516
    %v518 = vpop.f32.mrf.mxu0
    %v519 = vadd.f32 0.0, %v518
    %v520 = vpop.f32.mrf.mxu0
    %v521 = vadd.f32 0.0, %v520
    %v522 = vpop.f32.mrf.mxu0
    %v523 = vadd.f32 0.0, %v522
    %524 = vdwg.mxu0
    %v525 = vld [vmem:[%s4 + $0x1] sm:$0x1]
    %v526 = vlaneseq
    %v527 = vshrl.u32 %v526, 7
    %v528 = vsub.s32 0, %v527
    %v529 = vrot.slane %v525, %v528
    %v530 = vadd.f32 %v517, %v529
    %v531 = vadd.f32 %v521, %v529
    %v532 = vld [vmem:[%s4 + $0x2] sm:$0x1]
    %v533 = vlaneseq
    %v534 = vshrl.u32 %v533, 7
    %v535 = vsub.s32 0, %v534
    %v536 = vrot.slane %v532, %v535
    %v537 = vmul.f32 %v530, %v536
    %v538 = vmul.f32 %v531, %v536
    %v539 = vld [vmem:[%s4 + $0x3] sm:$0x1]
    %v540 = vlaneseq
    %v541 = vshrl.u32 %v540, 7
    %v542 = vsub.s32 0, %v541
    %v543 = vrot.slane %v539, %v542
    %v544 = vadd.f32 %v537, %v543
    %v545 = vadd.f32 %v538, %v543
    %vm546 = vcmp.ge.f32.partialorder %v544, 0.0
    %vm547 = vcmp.ge.f32.partialorder %v545, 0.0
    %v548 = vmul.f32 %v544, 0.01
    %v549 = vmul.f32 %v545, 0.01
    %v550 = vsel %vm546, %v544, %v548
    %v551 = vsel %vm547, %v545, %v549
    %v552 = vpack.c.bf16 %v551, %v550
    %v553 = vld [vmem:[#allocation14] sm:$0xf]
    %v554 = vld [vmem:[#allocation14 + $0x4] sm:$0xf]
    %v555 = vld [vmem:[#allocation14 + $0x8] sm:$0xf]
    %v556 = vld [vmem:[#allocation14 + $0xc] sm:$0xf]
    %v557 = vld [vmem:[#allocation14 + $0x10] sm:$0xf]
    %v558 = vld [vmem:[#allocation14 + $0x14] sm:$0xf]
    %v559 = vld [vmem:[#allocation14 + $0x18] sm:$0xf]
    %v560 = vld [vmem:[#allocation14 + $0x1c] sm:$0xf]
    %v561 = vld [vmem:[#allocation14 + $0x20] sm:$0xf]
    %v562 = vld [vmem:[#allocation14 + $0x24] sm:$0xf]
    %v563 = vld [vmem:[#allocation14 + $0x28] sm:$0xf]
    %v564 = vld [vmem:[#allocation14 + $0x2c] sm:$0xf]
    %v565 = vld [vmem:[#allocation14 + $0x30] sm:$0xf]
    %v566 = vld [vmem:[#allocation14 + $0x34] sm:$0xf]
    %v567 = vld [vmem:[#allocation14 + $0x38] sm:$0xf]
    %v568 = vld [vmem:[#allocation14 + $0x3c] sm:$0xf]
    %v569 = vld [vmem:[%s4 + $0x4] sm:$0x1]
    %v570 = vlaneseq
    %v571 = vshrl.u32 %v570, 7
    %v572 = vsub.s32 0, %v571
    %v573 = vrot.slane %v569, %v572
    %v590 = vunpack.c.l.b16 %v553
    %v591 = vunpack.c.l.b16 %v554
    %v592 = vunpack.c.l.b16 %v555
    %v593 = vunpack.c.l.b16 %v556
    %v594 = vunpack.c.l.b16 %v557
    %v595 = vunpack.c.l.b16 %v558
    %v596 = vunpack.c.l.b16 %v559
    %v597 = vunpack.c.l.b16 %v560
    %v598 = vunpack.c.l.b16 %v561
    %v599 = vunpack.c.l.b16 %v562
    %v600 = vunpack.c.l.b16 %v563
    %v601 = vunpack.c.l.b16 %v564
    %v602 = vunpack.c.l.b16 %v565
    %v603 = vunpack.c.l.b16 %v566
    %v604 = vunpack.c.l.b16 %v567
    %v605 = vunpack.c.l.b16 %v568
    %v606 = vpack.c.b16 %v591, %v590
    %v607 = vpack.c.b16 %v593, %v592
    %v608 = vpack.c.b16 %v595, %v594
    %v609 = vpack.c.b16 %v597, %v596
    %v610 = vpack.c.b16 %v599, %v598
    %v611 = vpack.c.b16 %v601, %v600
    %v612 = vpack.c.b16 %v603, %v602
    %v613 = vpack.c.b16 %v605, %v604
    %622 = vmatprep.subr.bf16.mxu0 0
    %623 = vmatpush1.bf16.msra.mxu0 %v613
    %624 = vmatprep.subr.bf16.mxu0 0
    %625 = vmatpush1.bf16.msra.mxu0 %v612
    %626 = vmatprep.subr.bf16.mxu0 0
    %627 = vmatpush1.bf16.msra.mxu0 %v611
    %628 = vmatprep.subr.bf16.mxu0 0
    %629 = vmatpush1.bf16.msra.mxu0 %v610
    %630 = vmatprep.subr.bf16.mxu0 0
    %631 = vmatpush1.bf16.msra.mxu0 %v609
    %632 = vmatprep.subr.bf16.mxu0 0
    %633 = vmatpush1.bf16.msra.mxu0 %v608
    %634 = vmatprep.subr.bf16.mxu0 0
    %635 = vmatpush1.bf16.msra.mxu0 %v607
    %636 = vmatprep.subr.bf16.mxu0 0
    %637 = vmatpush1.bf16.msra.mxu0 %v606
    %638 = vmatprep.subr.bf16.mxu0 0
    %639 = vmatpush2.bf16.msra.mxu0 0
    %640 = vmatprep.subr.bf16.mxu0 0
    %641 = vmatpush2.bf16.msra.mxu0 0
    %642 = vmatprep.subr.bf16.mxu0 0
    %643 = vmatpush2.bf16.msra.mxu0 0
    %644 = vmatprep.subr.bf16.mxu0 0
    %645 = vmatpush2.bf16.msra.mxu0 0
    %646 = vmatprep.subr.bf16.mxu0 0
    %647 = vmatpush2.bf16.msra.mxu0 0
    %648 = vmatprep.subr.bf16.mxu0 0
    %649 = vmatpush2.bf16.msra.mxu0 0
    %650 = vmatprep.subr.bf16.mxu0 0
    %651 = vmatpush2.bf16.msra.mxu0 0
    %652 = vmatprep.subr.bf16.mxu0 0
    %653 = vmatpush2.bf16.msra.mxu0 0
    %654 = vmatprep.mubr.bf16.mxu0 0
    %655 = vmatmul.mubr.bf16.gmra.mxu0 %v552
    %v656 = vpop.f32.mrf.mxu0
    %v657 = vadd.f32 %v573, %v656
    %v658 = vpop.f32.mrf.mxu0
    %v659 = vpop.f32.mrf.mxu0
    %v660 = vadd.f32 %v573, %v659
    %v661 = vpop.f32.mrf.mxu0
    %662 = vdwg.mxu0
    %v663 = vxor.u32 %v657, 2147483648
    %v664 = vxor.u32 %v660, 2147483648
    %v665 = vmul.f32 %v663, 1.442695
    %v666 = vpow.pop %v665
    %v667 = vmul.f32 %v664, 1.442695
    %v668 = vpow.pop %v667
    %v669 = vadd.f32 %v666, 1.0
    %v670 = vadd.f32 %v668, 1.0
    %v671 = vrcp.pop %v669
    %v672 = vmul.f32 1.0, %v671
    %v673 = vrcp.pop %v670
    %v674 = vmul.f32 1.0, %v673
    %v675 = vld [vmem:[%s5] sm:$0x3f]
    %v676 = vlaneseq
    %v677 = vshrl.u32 %v676, 7
    %v678 = vsub.s32 0, %v677
    %v679 = vrot.slane %v675, %v678
    %v680 = vadd.f32 %v519, %v679
    %v681 = vadd.f32 %v523, %v679
    %v682 = vld [vmem:[#allocation17] sm:$0xf]
    %v683 = vld [vmem:[#allocation17 + $0x4] sm:$0xf]
    %v684 = vld [vmem:[#allocation17 + $0x8] sm:$0xf]
    %v685 = vld [vmem:[#allocation17 + $0xc] sm:$0xf]
    %v686 = vld [vmem:[#allocation17 + $0x10] sm:$0xf]
    %v687 = vld [vmem:[#allocation17 + $0x14] sm:$0xf]
    %v688 = vld [vmem:[#allocation17 + $0x18] sm:$0xf]
    %v689 = vld [vmem:[#allocation17 + $0x1c] sm:$0xf]
    %v690 = vld [vmem:[#allocation17 + $0x20] sm:$0xf]
    %v691 = vld [vmem:[#allocation17 + $0x24] sm:$0xf]
    %v692 = vld [vmem:[#allocation17 + $0x28] sm:$0xf]
    %v693 = vld [vmem:[#allocation17 + $0x2c] sm:$0xf]
    %v694 = vld [vmem:[#allocation17 + $0x30] sm:$0xf]
    %v695 = vld [vmem:[#allocation17 + $0x34] sm:$0xf]
    %v696 = vld [vmem:[#allocation17 + $0x38] sm:$0xf]
    %v697 = vld [vmem:[#allocation17 + $0x3c] sm:$0xf]
    %v698 = vld [vmem:[#allocation19] sm:$0xf]
    %v699 = vld [vmem:[#allocation19 + $0x4] sm:$0xf]
    %v700 = vld [vmem:[#allocation19 + $0x8] sm:$0xf]
    %v701 = vld [vmem:[#allocation19 + $0xc] sm:$0xf]
    %v702 = vld [vmem:[#allocation19 + $0x10] sm:$0xf]
    %v703 = vld [vmem:[#allocation19 + $0x14] sm:$0xf]
    %v704 = vld [vmem:[#allocation19 + $0x18] sm:$0xf]
    %v705 = vld [vmem:[#allocation19 + $0x1c] sm:$0xf]
    %v706 = vld [vmem:[#allocation19 + $0x20] sm:$0xf]
    %v707 = vld [vmem:[#allocation19 + $0x24] sm:$0xf]
    %v708 = vld [vmem:[#allocation19 + $0x28] sm:$0xf]
    %v709 = vld [vmem:[#allocation19 + $0x2c] sm:$0xf]
    %v710 = vld [vmem:[#allocation19 + $0x30] sm:$0xf]
    %v711 = vld [vmem:[#allocation19 + $0x34] sm:$0xf]
    %v712 = vld [vmem:[#allocation19 + $0x38] sm:$0xf]
    %v713 = vld [vmem:[#allocation19 + $0x3c] sm:$0xf]
    %v714 = vld [vmem:[#allocation10] sm:$0x1]
    %v715 = vlaneseq
    %v716 = vshrl.u32 %v715, 7
    %v717 = vsub.s32 1, %v716
    %v718 = vrot.slane %v675, %v717
    %v719 = vmul.f32 %v680, %v718
    %v720 = vmul.f32 %v681, %v718
    %v721 = vlaneseq
    %v722 = vshrl.u32 %v721, 7
    %v723 = vsub.s32 2, %v722
    %v724 = vrot.slane %v675, %v723
    %v725 = vadd.f32 %v719, %v724
    %v726 = vadd.f32 %v720, %v724
    %vm727 = vcmp.ge.f32.partialorder %v725, 0.0
    %vm728 = vcmp.ge.f32.partialorder %v726, 0.0
    %v729 = vmul.f32 %v725, 0.01
    %v730 = vmul.f32 %v726, 0.01
    %v731 = vsel %vm727, %v725, %v729
    %v732 = vsel %vm728, %v726, %v730
    %v733 = vpack.c.bf16 %v732, %v731
    %v734 = vlaneseq
    %v735 = vshrl.u32 %v734, 7
    %v736 = vsub.s32 3, %v735
    %v737 = vrot.slane %v675, %v736
    %v754 = vunpack.c.l.b16 %v682
    %v755 = vunpack.c.l.b16 %v683
    %v756 = vunpack.c.l.b16 %v684
    %v757 = vunpack.c.l.b16 %v685
    %v758 = vunpack.c.l.b16 %v686
    %v759 = vunpack.c.l.b16 %v687
    %v760 = vunpack.c.l.b16 %v688
    %v761 = vunpack.c.l.b16 %v689
    %v762 = vunpack.c.l.b16 %v690
    %v763 = vunpack.c.l.b16 %v691
    %v764 = vunpack.c.l.b16 %v692
    %v765 = vunpack.c.l.b16 %v693
    %v766 = vunpack.c.l.b16 %v694
    %v767 = vunpack.c.l.b16 %v695
    %v768 = vunpack.c.l.b16 %v696
    %v769 = vunpack.c.l.b16 %v697
    %v770 = vpack.c.b16 %v755, %v754
    %v771 = vpack.c.b16 %v757, %v756
    %v772 = vpack.c.b16 %v759, %v758
    %v773 = vpack.c.b16 %v761, %v760
    %v774 = vpack.c.b16 %v763, %v762
    %v775 = vpack.c.b16 %v765, %v764
    %v776 = vpack.c.b16 %v767, %v766
    %v777 = vpack.c.b16 %v769, %v768
    %786 = vmatprep.subr.bf16.mxu0 0
    %787 = vmatpush1.bf16.msra.mxu0 %v777
    %788 = vmatprep.subr.bf16.mxu0 0
    %789 = vmatpush1.bf16.msra.mxu0 %v776
    %790 = vmatprep.subr.bf16.mxu0 0
    %791 = vmatpush1.bf16.msra.mxu0 %v775
    %792 = vmatprep.subr.bf16.mxu0 0
    %793 = vmatpush1.bf16.msra.mxu0 %v774
    %794 = vmatprep.subr.bf16.mxu0 0
    %795 = vmatpush1.bf16.msra.mxu0 %v773
    %796 = vmatprep.subr.bf16.mxu0 0
    %797 = vmatpush1.bf16.msra.mxu0 %v772
    %798 = vmatprep.subr.bf16.mxu0 0
    %799 = vmatpush1.bf16.msra.mxu0 %v771
    %800 = vmatprep.subr.bf16.mxu0 0
    %801 = vmatpush1.bf16.msra.mxu0 %v770
    %802 = vmatprep.subr.bf16.mxu0 0
    %803 = vmatpush2.bf16.msra.mxu0 0
    %804 = vmatprep.subr.bf16.mxu0 0
    %805 = vmatpush2.bf16.msra.mxu0 0
    %806 = vmatprep.subr.bf16.mxu0 0
    %807 = vmatpush2.bf16.msra.mxu0 0
    %808 = vmatprep.subr.bf16.mxu0 0
    %809 = vmatpush2.bf16.msra.mxu0 0
    %810 = vmatprep.subr.bf16.mxu0 0
    %811 = vmatpush2.bf16.msra.mxu0 0
    %812 = vmatprep.subr.bf16.mxu0 0
    %813 = vmatpush2.bf16.msra.mxu0 0
    %814 = vmatprep.subr.bf16.mxu0 0
    %815 = vmatpush2.bf16.msra.mxu0 0
    %816 = vmatprep.subr.bf16.mxu0 0
    %817 = vmatpush2.bf16.msra.mxu0 0
    %818 = vmatprep.mubr.bf16.mxu0 0
    %819 = vmatmul.mubr.bf16.gmra.mxu0 %v733
    %v820 = vpop.f32.mrf.mxu0
    %v821 = vadd.f32 %v737, %v820
    %v822 = vpop.f32.mrf.mxu0
    %v823 = vpop.f32.mrf.mxu0
    %v824 = vadd.f32 %v737, %v823
    %v825 = vpop.f32.mrf.mxu0
    %826 = vdwg.mxu0
    %v827 = vlaneseq
    %v828 = vshrl.u32 %v827, 7
    %v829 = vsub.s32 4, %v828
    %v830 = vrot.slane %v675, %v829
    %v831 = vmul.f32 %v821, %v830
    %v832 = vmul.f32 %v824, %v830
    %v833 = vlaneseq
    %v834 = vshrl.u32 %v833, 7
    %v835 = vsub.s32 5, %v834
    %v836 = vrot.slane %v675, %v835
    %v837 = vadd.f32 %v831, %v836
    %v838 = vadd.f32 %v832, %v836
    %vm839 = vcmp.ge.f32.partialorder %v837, 0.0
    %vm840 = vcmp.ge.f32.partialorder %v838, 0.0
    %v841 = vmul.f32 %v837, 0.01
    %v842 = vmul.f32 %v838, 0.01
    %v843 = vsel %vm839, %v837, %v841
    %v844 = vsel %vm840, %v838, %v842
    %v845 = vpack.c.bf16 %v844, %v843
    %v847 = vlaneseq
    %v848 = vshrl.u32 %v847, 7
    %v849 = vsub.s32 0, %v848
    %v850 = vrot.slane %v714, %v849
    %v868 = vunpack.c.l.b16 %v698
    %v869 = vunpack.c.l.b16 %v699
    %v870 = vunpack.c.l.b16 %v700
    %v871 = vunpack.c.l.b16 %v701
    %v872 = vunpack.c.l.b16 %v702
    %v873 = vunpack.c.l.b16 %v703
    %v874 = vunpack.c.l.b16 %v704
    %v875 = vunpack.c.l.b16 %v705
    %v876 = vunpack.c.l.b16 %v706
    %v877 = vunpack.c.l.b16 %v707
    %v878 = vunpack.c.l.b16 %v708
    %v879 = vunpack.c.l.b16 %v709
    %v880 = vunpack.c.l.b16 %v710
    %v881 = vunpack.c.l.b16 %v711
    %v882 = vunpack.c.l.b16 %v712
    %v883 = vunpack.c.l.b16 %v713
    %v884 = vpack.c.b16 %v869, %v868
    %v885 = vpack.c.b16 %v871, %v870
    %v886 = vpack.c.b16 %v873, %v872
    %v887 = vpack.c.b16 %v875, %v874
    %v888 = vpack.c.b16 %v877, %v876
    %v889 = vpack.c.b16 %v879, %v878
    %v890 = vpack.c.b16 %v881, %v880
    %v891 = vpack.c.b16 %v883, %v882
    %900 = vmatprep.subr.bf16.mxu0 0
    %901 = vmatpush1.bf16.msra.mxu0 %v891
    %902 = vmatprep.subr.bf16.mxu0 0
    %903 = vmatpush1.bf16.msra.mxu0 %v890
    %904 = vmatprep.subr.bf16.mxu0 0
    %905 = vmatpush1.bf16.msra.mxu0 %v889
    %906 = vmatprep.subr.bf16.mxu0 0
    %907 = vmatpush1.bf16.msra.mxu0 %v888
    %908 = vmatprep.subr.bf16.mxu0 0
    %909 = vmatpush1.bf16.msra.mxu0 %v887
    %910 = vmatprep.subr.bf16.mxu0 0
    %911 = vmatpush1.bf16.msra.mxu0 %v886
    %912 = vmatprep.subr.bf16.mxu0 0
    %913 = vmatpush1.bf16.msra.mxu0 %v885
    %914 = vmatprep.subr.bf16.mxu0 0
    %915 = vmatpush1.bf16.msra.mxu0 %v884
    %916 = vmatprep.subr.bf16.mxu0 0
    %917 = vmatpush2.bf16.msra.mxu0 0
    %918 = vmatprep.subr.bf16.mxu0 0
    %919 = vmatpush2.bf16.msra.mxu0 0
    %920 = vmatprep.subr.bf16.mxu0 0
    %921 = vmatpush2.bf16.msra.mxu0 0
    %922 = vmatprep.subr.bf16.mxu0 0
    %923 = vmatpush2.bf16.msra.mxu0 0
    %924 = vmatprep.subr.bf16.mxu0 0
    %925 = vmatpush2.bf16.msra.mxu0 0
    %926 = vmatprep.subr.bf16.mxu0 0
    %927 = vmatpush2.bf16.msra.mxu0 0
    %928 = vmatprep.subr.bf16.mxu0 0
    %929 = vmatpush2.bf16.msra.mxu0 0
    %930 = vmatprep.subr.bf16.mxu0 0
    %931 = vmatpush2.bf16.msra.mxu0 0
    %932 = vmatprep.mubr.bf16.mxu0 0
    %933 = vmatmul.mubr.bf16.gmra.mxu0 %v845
    %v934 = vpop.f32.mrf.mxu0
    %v935 = vadd.f32 %v850, %v934
    %v936 = vpop.f32.mrf.mxu0
    %v937 = vpop.f32.mrf.mxu0
    %v938 = vadd.f32 %v850, %v937
    %v939 = vpop.f32.mrf.mxu0
    %940 = vdwg.mxu0
    %v941 = vadd.f32 %v935, %v383
    %v942 = vadd.f32 %v938, %v384
    %s943 = scalar_lea.vmem %s5, 8
    %v944 = vld [vmem:[%s943] sm:$0x3f]
    %v945 = vpack.c.bf16 %v942, %v941
    %s946 = scalar_lea.vmem [#allocation16], 64
    %v947 = vld [vmem:[%s946] sm:$0xf]
    %v948 = vld [vmem:[%s946 + $0x4] sm:$0xf]
    %v949 = vld [vmem:[%s946 + $0x8] sm:$0xf]
    %v950 = vld [vmem:[%s946 + $0xc] sm:$0xf]
    %v951 = vld [vmem:[%s946 + $0x10] sm:$0xf]
    %v952 = vld [vmem:[%s946 + $0x14] sm:$0xf]
    %v953 = vld [vmem:[%s946 + $0x18] sm:$0xf]
    %v954 = vld [vmem:[%s946 + $0x1c] sm:$0xf]
    %v955 = vld [vmem:[%s946 + $0x20] sm:$0xf]
    %v956 = vld [vmem:[%s946 + $0x24] sm:$0xf]
    %v957 = vld [vmem:[%s946 + $0x28] sm:$0xf]
    %v958 = vld [vmem:[%s946 + $0x2c] sm:$0xf]
    %v959 = vld [vmem:[%s946 + $0x30] sm:$0xf]
    %v960 = vld [vmem:[%s946 + $0x34] sm:$0xf]
    %v961 = vld [vmem:[%s946 + $0x38] sm:$0xf]
    %v962 = vld [vmem:[%s946 + $0x3c] sm:$0xf]
    %v963 = vlaneseq
    %v964 = vshrl.u32 %v963, 7
    %v965 = vsub.s32 0, %v964
    %v966 = vrot.slane %v944, %v965
    %v983 = vunpack.c.l.b16 %v947
    %v984 = vunpack.c.l.b16 %v948
    %v985 = vunpack.c.l.b16 %v949
    %v986 = vunpack.c.l.b16 %v950
    %v987 = vunpack.c.l.b16 %v951
    %v988 = vunpack.c.l.b16 %v952
    %v989 = vunpack.c.l.b16 %v953
    %v990 = vunpack.c.l.b16 %v954
    %v991 = vunpack.c.l.b16 %v955
    %v992 = vunpack.c.l.b16 %v956
    %v993 = vunpack.c.l.b16 %v957
    %v994 = vunpack.c.l.b16 %v958
    %v995 = vunpack.c.l.b16 %v959
    %v996 = vunpack.c.l.b16 %v960
    %v997 = vunpack.c.l.b16 %v961
    %v998 = vunpack.c.l.b16 %v962
    %v999 = vpack.c.b16 %v984, %v983
    %v1000 = vpack.c.b16 %v986, %v985
    %v1001 = vpack.c.b16 %v988, %v987
    %v1002 = vpack.c.b16 %v990, %v989
    %v1003 = vpack.c.b16 %v992, %v991
    %v1004 = vpack.c.b16 %v994, %v993
    %v1005 = vpack.c.b16 %v996, %v995
    %v1006 = vpack.c.b16 %v998, %v997
    %1015 = vmatprep.subr.bf16.mxu0 0
    %1016 = vmatpush1.bf16.msra.mxu0 %v1006
    %1017 = vmatprep.subr.bf16.mxu0 0
    %1018 = vmatpush1.bf16.msra.mxu0 %v1005
    %1019 = vmatprep.subr.bf16.mxu0 0
    %1020 = vmatpush1.bf16.msra.mxu0 %v1004
    %1021 = vmatprep.subr.bf16.mxu0 0
    %1022 = vmatpush1.bf16.msra.mxu0 %v1003
    %1023 = vmatprep.subr.bf16.mxu0 0
    %1024 = vmatpush1.bf16.msra.mxu0 %v1002
    %1025 = vmatprep.subr.bf16.mxu0 0
    %1026 = vmatpush1.bf16.msra.mxu0 %v1001
    %1027 = vmatprep.subr.bf16.mxu0 0
    %1028 = vmatpush1.bf16.msra.mxu0 %v1000
    %1029 = vmatprep.subr.bf16.mxu0 0
    %1030 = vmatpush1.bf16.msra.mxu0 %v999
    %1031 = vmatprep.subr.bf16.mxu0 0
    %1032 = vmatpush2.bf16.msra.mxu0 0
    %1033 = vmatprep.subr.bf16.mxu0 0
    %1034 = vmatpush2.bf16.msra.mxu0 0
    %1035 = vmatprep.subr.bf16.mxu0 0
    %1036 = vmatpush2.bf16.msra.mxu0 0
    %1037 = vmatprep.subr.bf16.mxu0 0
    %1038 = vmatpush2.bf16.msra.mxu0 0
    %1039 = vmatprep.subr.bf16.mxu0 0
    %1040 = vmatpush2.bf16.msra.mxu0 0
    %1041 = vmatprep.subr.bf16.mxu0 0
    %1042 = vmatpush2.bf16.msra.mxu0 0
    %1043 = vmatprep.subr.bf16.mxu0 0
    %1044 = vmatpush2.bf16.msra.mxu0 0
    %1045 = vmatprep.subr.bf16.mxu0 0
    %1046 = vmatpush2.bf16.msra.mxu0 0
    %1047 = vmatprep.mubr.bf16.mxu0 0
    %1048 = vmatmul.mubr.bf16.gmra.mxu0 %v945
    %v1049 = vpop.f32.mrf.mxu0
    %v1050 = vadd.f32 %v966, %v1049
    %v1051 = vpop.f32.mrf.mxu0
    %v1052 = vpop.f32.mrf.mxu0
    %v1053 = vadd.f32 %v966, %v1052
    %v1054 = vpop.f32.mrf.mxu0
    %1055 = vdwg.mxu0
    %s1056 = scalar_lea.vmem [#allocation17], 64
    %v1057 = vld [vmem:[%s1056] sm:$0xf]
    %v1058 = vld [vmem:[%s1056 + $0x4] sm:$0xf]
    %v1059 = vld [vmem:[%s1056 + $0x8] sm:$0xf]
    %v1060 = vld [vmem:[%s1056 + $0xc] sm:$0xf]
    %v1061 = vld [vmem:[%s1056 + $0x10] sm:$0xf]
    %v1062 = vld [vmem:[%s1056 + $0x14] sm:$0xf]
    %v1063 = vld [vmem:[%s1056 + $0x18] sm:$0xf]
    %v1064 = vld [vmem:[%s1056 + $0x1c] sm:$0xf]
    %v1065 = vld [vmem:[%s1056 + $0x20] sm:$0xf]
    %v1066 = vld [vmem:[%s1056 + $0x24] sm:$0xf]
    %v1067 = vld [vmem:[%s1056 + $0x28] sm:$0xf]
    %v1068 = vld [vmem:[%s1056 + $0x2c] sm:$0xf]
    %v1069 = vld [vmem:[%s1056 + $0x30] sm:$0xf]
    %v1070 = vld [vmem:[%s1056 + $0x34] sm:$0xf]
    %v1071 = vld [vmem:[%s1056 + $0x38] sm:$0xf]
    %v1072 = vld [vmem:[%s1056 + $0x3c] sm:$0xf]
    %s1073 = scalar_lea.vmem [#allocation19], 64
    %v1074 = vld [vmem:[%s1073] sm:$0xf]
    %v1075 = vld [vmem:[%s1073 + $0x4] sm:$0xf]
    %v1076 = vld [vmem:[%s1073 + $0x8] sm:$0xf]
    %v1077 = vld [vmem:[%s1073 + $0xc] sm:$0xf]
    %v1078 = vld [vmem:[%s1073 + $0x10] sm:$0xf]
    %v1079 = vld [vmem:[%s1073 + $0x14] sm:$0xf]
    %v1080 = vld [vmem:[%s1073 + $0x18] sm:$0xf]
    %v1081 = vld [vmem:[%s1073 + $0x1c] sm:$0xf]
    %v1082 = vld [vmem:[%s1073 + $0x20] sm:$0xf]
    %v1083 = vld [vmem:[%s1073 + $0x24] sm:$0xf]
    %v1084 = vld [vmem:[%s1073 + $0x28] sm:$0xf]
    %v1085 = vld [vmem:[%s1073 + $0x2c] sm:$0xf]
    %v1086 = vld [vmem:[%s1073 + $0x30] sm:$0xf]
    %v1087 = vld [vmem:[%s1073 + $0x34] sm:$0xf]
    %v1088 = vld [vmem:[%s1073 + $0x38] sm:$0xf]
    %v1089 = vld [vmem:[%s1073 + $0x3c] sm:$0xf]
    %s1090 = scalar_lea.vmem [#allocation10], 1
    %v1091 = vld [vmem:[%s1090] sm:$0x1]
    %v1092 = vlaneseq
    %v1093 = vshrl.u32 %v1092, 7
    %v1094 = vsub.s32 1, %v1093
    %v1095 = vrot.slane %v944, %v1094
    %v1096 = vmul.f32 %v1050, %v1095
    %v1097 = vmul.f32 %v1053, %v1095
    %v1098 = vlaneseq
    %v1099 = vshrl.u32 %v1098, 7
    %v1100 = vsub.s32 2, %v1099
    %v1101 = vrot.slane %v944, %v1100
    %v1102 = vadd.f32 %v1096, %v1101
    %v1103 = vadd.f32 %v1097, %v1101
    %vm1104 = vcmp.ge.f32.partialorder %v1102, 0.0
    %vm1105 = vcmp.ge.f32.partialorder %v1103, 0.0
    %v1106 = vmul.f32 %v1102, 0.01
    %v1107 = vmul.f32 %v1103, 0.01
    %v1108 = vsel %vm1104, %v1102, %v1106
    %v1109 = vsel %vm1105, %v1103, %v1107
    %v1110 = vpack.c.bf16 %v1109, %v1108
    %v1111 = vlaneseq
    %v1112 = vshrl.u32 %v1111, 7
    %v1113 = vsub.s32 3, %v1112
    %v1114 = vrot.slane %v944, %v1113
    %v1131 = vunpack.c.l.b16 %v1057
    %v1132 = vunpack.c.l.b16 %v1058
    %v1133 = vunpack.c.l.b16 %v1059
    %v1134 = vunpack.c.l.b16 %v1060
    %v1135 = vunpack.c.l.b16 %v1061
    %v1136 = vunpack.c.l.b16 %v1062
    %v1137 = vunpack.c.l.b16 %v1063
    %v1138 = vunpack.c.l.b16 %v1064
    %v1139 = vunpack.c.l.b16 %v1065
    %v1140 = vunpack.c.l.b16 %v1066
    %v1141 = vunpack.c.l.b16 %v1067
    %v1142 = vunpack.c.l.b16 %v1068
    %v1143 = vunpack.c.l.b16 %v1069
    %v1144 = vunpack.c.l.b16 %v1070
    %v1145 = vunpack.c.l.b16 %v1071
    %v1146 = vunpack.c.l.b16 %v1072
    %v1147 = vpack.c.b16 %v1132, %v1131
    %v1148 = vpack.c.b16 %v1134, %v1133
    %v1149 = vpack.c.b16 %v1136, %v1135
    %v1150 = vpack.c.b16 %v1138, %v1137
    %v1151 = vpack.c.b16 %v1140, %v1139
    %v1152 = vpack.c.b16 %v1142, %v1141
    %v1153 = vpack.c.b16 %v1144, %v1143
    %v1154 = vpack.c.b16 %v1146, %v1145
    %1163 = vmatprep.subr.bf16.mxu0 0
    %1164 = vmatpush1.bf16.msra.mxu0 %v1154
    %1165 = vmatprep.subr.bf16.mxu0 0
    %1166 = vmatpush1.bf16.msra.mxu0 %v1153
    %1167 = vmatprep.subr.bf16.mxu0 0
    %1168 = vmatpush1.bf16.msra.mxu0 %v1152
    %1169 = vmatprep.subr.bf16.mxu0 0
    %1170 = vmatpush1.bf16.msra.mxu0 %v1151
    %1171 = vmatprep.subr.bf16.mxu0 0
    %1172 = vmatpush1.bf16.msra.mxu0 %v1150
    %1173 = vmatprep.subr.bf16.mxu0 0
    %1174 = vmatpush1.bf16.msra.mxu0 %v1149
    %1175 = vmatprep.subr.bf16.mxu0 0
    %1176 = vmatpush1.bf16.msra.mxu0 %v1148
    %1177 = vmatprep.subr.bf16.mxu0 0
    %1178 = vmatpush1.bf16.msra.mxu0 %v1147
    %1179 = vmatprep.subr.bf16.mxu0 0
    %1180 = vmatpush2.bf16.msra.mxu0 0
    %1181 = vmatprep.subr.bf16.mxu0 0
    %1182 = vmatpush2.bf16.msra.mxu0 0
    %1183 = vmatprep.subr.bf16.mxu0 0
    %1184 = vmatpush2.bf16.msra.mxu0 0
    %1185 = vmatprep.subr.bf16.mxu0 0
    %1186 = vmatpush2.bf16.msra.mxu0 0
    %1187 = vmatprep.subr.bf16.mxu0 0
    %1188 = vmatpush2.bf16.msra.mxu0 0
    %1189 = vmatprep.subr.bf16.mxu0 0
    %1190 = vmatpush2.bf16.msra.mxu0 0
    %1191 = vmatprep.subr.bf16.mxu0 0
    %1192 = vmatpush2.bf16.msra.mxu0 0
    %1193 = vmatprep.subr.bf16.mxu0 0
    %1194 = vmatpush2.bf16.msra.mxu0 0
    %1195 = vmatprep.mubr.bf16.mxu0 0
    %1196 = vmatmul.mubr.bf16.gmra.mxu0 %v1110
    %v1197 = vpop.f32.mrf.mxu0
    %v1198 = vadd.f32 %v1114, %v1197
    %v1199 = vpop.f32.mrf.mxu0
    %v1200 = vpop.f32.mrf.mxu0
    %v1201 = vadd.f32 %v1114, %v1200
    %v1202 = vpop.f32.mrf.mxu0
    %1203 = vdwg.mxu0
    %v1204 = vlaneseq
    %v1205 = vshrl.u32 %v1204, 7
    %v1206 = vsub.s32 4, %v1205
    %v1207 = vrot.slane %v944, %v1206
    %v1208 = vmul.f32 %v1198, %v1207
    %v1209 = vmul.f32 %v1201, %v1207
    %v1210 = vlaneseq
    %v1211 = vshrl.u32 %v1210, 7
    %v1212 = vsub.s32 5, %v1211
    %v1213 = vrot.slane %v944, %v1212
    %v1214 = vadd.f32 %v1208, %v1213
    %v1215 = vadd.f32 %v1209, %v1213
    %vm1216 = vcmp.ge.f32.partialorder %v1214, 0.0
    %vm1217 = vcmp.ge.f32.partialorder %v1215, 0.0
    %v1218 = vmul.f32 %v1214, 0.01
    %v1219 = vmul.f32 %v1215, 0.01
    %v1220 = vsel %vm1216, %v1214, %v1218
    %v1221 = vsel %vm1217, %v1215, %v1219
    %v1222 = vpack.c.bf16 %v1221, %v1220
    %v1224 = vlaneseq
    %v1225 = vshrl.u32 %v1224, 7
    %v1226 = vsub.s32 0, %v1225
    %v1227 = vrot.slane %v1091, %v1226
    %v1245 = vunpack.c.l.b16 %v1074
    %v1246 = vunpack.c.l.b16 %v1075
    %v1247 = vunpack.c.l.b16 %v1076
    %v1248 = vunpack.c.l.b16 %v1077
    %v1249 = vunpack.c.l.b16 %v1078
    %v1250 = vunpack.c.l.b16 %v1079
    %v1251 = vunpack.c.l.b16 %v1080
    %v1252 = vunpack.c.l.b16 %v1081
    %v1253 = vunpack.c.l.b16 %v1082
    %v1254 = vunpack.c.l.b16 %v1083
    %v1255 = vunpack.c.l.b16 %v1084
    %v1256 = vunpack.c.l.b16 %v1085
    %v1257 = vunpack.c.l.b16 %v1086
    %v1258 = vunpack.c.l.b16 %v1087
    %v1259 = vunpack.c.l.b16 %v1088
    %v1260 = vunpack.c.l.b16 %v1089
    %v1261 = vpack.c.b16 %v1246, %v1245
    %v1262 = vpack.c.b16 %v1248, %v1247
    %v1263 = vpack.c.b16 %v1250, %v1249
    %v1264 = vpack.c.b16 %v1252, %v1251
    %v1265 = vpack.c.b16 %v1254, %v1253
    %v1266 = vpack.c.b16 %v1256, %v1255
    %v1267 = vpack.c.b16 %v1258, %v1257
    %v1268 = vpack.c.b16 %v1260, %v1259
    %1277 = vmatprep.subr.bf16.mxu0 0
    %1278 = vmatpush1.bf16.msra.mxu0 %v1268
    %1279 = vmatprep.subr.bf16.mxu0 0
    %1280 = vmatpush1.bf16.msra.mxu0 %v1267
    %1281 = vmatprep.subr.bf16.mxu0 0
    %1282 = vmatpush1.bf16.msra.mxu0 %v1266
    %1283 = vmatprep.subr.bf16.mxu0 0
    %1284 = vmatpush1.bf16.msra.mxu0 %v1265
    %1285 = vmatprep.subr.bf16.mxu0 0
    %1286 = vmatpush1.bf16.msra.mxu0 %v1264
    %1287 = vmatprep.subr.bf16.mxu0 0
    %1288 = vmatpush1.bf16.msra.mxu0 %v1263
    %1289 = vmatprep.subr.bf16.mxu0 0
    %1290 = vmatpush1.bf16.msra.mxu0 %v1262
    %1291 = vmatprep.subr.bf16.mxu0 0
    %1292 = vmatpush1.bf16.msra.mxu0 %v1261
    %1293 = vmatprep.subr.bf16.mxu0 0
    %1294 = vmatpush2.bf16.msra.mxu0 0
    %1295 = vmatprep.subr.bf16.mxu0 0
    %1296 = vmatpush2.bf16.msra.mxu0 0
    %1297 = vmatprep.subr.bf16.mxu0 0
    %1298 = vmatpush2.bf16.msra.mxu0 0
    %1299 = vmatprep.subr.bf16.mxu0 0
    %1300 = vmatpush2.bf16.msra.mxu0 0
    %1301 = vmatprep.subr.bf16.mxu0 0
    %1302 = vmatpush2.bf16.msra.mxu0 0
    %1303 = vmatprep.subr.bf16.mxu0 0
    %1304 = vmatpush2.bf16.msra.mxu0 0
    %1305 = vmatprep.subr.bf16.mxu0 0
    %1306 = vmatpush2.bf16.msra.mxu0 0
    %1307 = vmatprep.subr.bf16.mxu0 0
    %1308 = vmatpush2.bf16.msra.mxu0 0
    %1309 = vmatprep.mubr.bf16.mxu0 0
    %1310 = vmatmul.mubr.bf16.gmra.mxu0 %v1222
    %v1311 = vpop.f32.mrf.mxu0
    %v1312 = vadd.f32 %v1227, %v1311
    %v1313 = vpop.f32.mrf.mxu0
    %v1314 = vpop.f32.mrf.mxu0
    %v1315 = vadd.f32 %v1227, %v1314
    %v1316 = vpop.f32.mrf.mxu0
    %1317 = vdwg.mxu0
    %v1318 = vadd.f32 %v1312, %v941
    %v1319 = vadd.f32 %v1315, %v942
    %v1320 = vmul.f32 %v194, %v672
    %v1321 = vmul.f32 %v195, %v674
    %v1322 = vsub.f32 1.0, %v672
    %v1323 = vsub.f32 1.0, %v674
    %v1324 = vmul.f32 %v1318, %v1322
    %v1325 = vmul.f32 %v1319, %v1323
    %v1326 = vadd.f32 %v1320, %v1324
    %v1327 = vadd.f32 %v1321, %v1325
    %1328 = vst.msk [vmem:[#allocation20] sm:$0xff] %vm333, %v1326
    %1329 = vst.msk [vmem:[#allocation20 + $0x8] sm:$0xff] %vm333, %v1327
    // Predicated region
    $region102: #{forward.1} parent=1 // pred_check
      _
    $region103: #{forward.1} parent=1 // pred_check_branch
      %1331 = sbr.rel (0) target = $region105
    $region104: #{forward.1} parent=1 // pred_region
      %s1333 = ssub.s32 256, 256
      %1334 = vsyncadd [#allocation4], %s1333
      %s1335 = sshll.u32 [#allocation20], 4
      %s1336 = int_to_ptr.vmem [resolvable:$true] %s1335
      %1341 = dma.vmem_to_hbm [thread:$0]  %s1336, 256, %s14, [#allocation4], 128, 128, 8
    $region105: #{forward.1} parent=1 // pred_fallthru
      _
    // Predicated region
    $region106: #{forward.1} parent=1 // pred_check
      _
    $region107: #{forward.1} parent=1 // pred_check_branch
      %1343 = sbr.rel (0) target = $region109
    $region108: #{forward.1} parent=1 // pred_region
      %1344 = dma.done [#allocation4], 256
    $region109: #{forward.1} parent=1 // pred_fallthru
      _
    %1345 = vsyncpa [#allocation3], 1
    %1346 = vsyncpa [#allocation6], 1
    %1347 = vsyncpa [#allocation9], 1
    %1348 = vsyncpa [#allocation12], 1
    %1349 = vsyncpa [#allocation15], 1
    %1350 = vsyncpa [#allocation18], 1
    %1351 = vsyncpa [#allocation4], 1

</llo_original>
